<compile_context>
chip_gen: v7x
topology: tpu7x:2x2x1
jax: 0.10.0
libtpu: 0.0.40
codegen_flags: <defaults>
</compile_context>

<pallas_src>
import functools

import jax
import jax.numpy as jnp
from jax.experimental import pallas as pl
from jax.experimental.pallas import tpu as pltpu


# ----------------------------------------------------------------------------- kernel
def decoder_kernel(z_ref, wih_ref, whh_ref, b_ref,
                   wlin_ref, blin_ref, wpred_ref, bpred_ref,
                   out_ref, pred_ref, hseq_ref):
    """Multi-layer LSTM recurrence + both output heads, fully in VMEM.

    z_ref    : (Bt, H)        repeated latent (identical at every timestep)
    wih_ref  : (L, H, 4H)     weight_ih_l{k} pre-transposed  (gate order i, f, g, o)
    whh_ref  : (L, H, 4H)     weight_hh_l{k} pre-transposed
    b_ref    : (L, 1, 4H)     bias_ih + bias_hh (folded in wrapper)
    wlin_ref : (H, F), blin_ref : (1, F)   nn.Linear(hidden, out_features), pre-transposed
    wpred_ref: (H, S), bpred_ref: (1, S)   nn.Linear(hidden, sequence), pre-transposed
    out_ref  : (Bt, S, F)     tanh(linear(output))   -- batch-first, like PyTorch
    pred_ref : (L, Bt, S)     tanh(linear_pred(h_t))
    hseq_ref : (S, Bt, H)     VMEM scratch: top-layer hidden state per timestep
    """
    z = z_ref[...]
    Bt, H = z.shape
    L = wih_ref.shape[0]
    S = hseq_ref.shape[0]
    F = out_ref.shape[2]

    # ---- hoisted, loop-invariant work --------------------------------------
    whh0 = whh_ref[0]                                              # (H, 4H)
    zproj = (jnp.dot(z, wih_ref[0], preferred_element_type=jnp.float32)
             + b_ref[0])                                           # (Bt, 4H)
    # fused [W_ih; W_hh] for layers > 0, built once outside the time loop
    wcat = [None] + [jnp.concatenate([wih_ref[l], whh_ref[l]], axis=0)
                     for l in range(1, L)]                         # (2H, 4H) each
    bias = [None] + [b_ref[l] for l in range(1, L)]                # (1, 4H) each

    def lstm_cell(gates, c_prev):
        i_g = jax.nn.sigmoid(gates[:, 0 * H:1 * H])
        f_g = jax.nn.sigmoid(gates[:, 1 * H:2 * H])
        g_g = jnp.tanh(gates[:, 2 * H:3 * H])
        o_g = jax.nn.sigmoid(gates[:, 3 * H:4 * H])
        c_new = f_g * c_prev + i_g * g_g
        h_new = o_g * jnp.tanh(c_new)
        return h_new, c_new

    def step(t, carry):
        hs, cs = carry                    # tuples of (Bt, H) per layer
        new_hs, new_cs = [], []
        # layer 0: input projection precomputed -> single matmul per step
        gates = zproj + jnp.dot(hs[0], whh0, preferred_element_type=jnp.float32)
        h_new, c_new = lstm_cell(gates, cs[0])
        new_hs.append(h_new)
        new_cs.append(c_new)
        x = h_new
        for l in range(1, L):             # static unroll over layers
            xh = jnp.concatenate([x, hs[l]], axis=-1)              # (Bt, 2H)
            gates = (jnp.dot(xh, wcat[l], preferred_element_type=jnp.float32)
                     + bias[l])
            h_new, c_new = lstm_cell(gates, cs[l])
            new_hs.append(h_new)
            new_cs.append(c_new)
            x = h_new
        hseq_ref[t] = x                   # defer the output head
        return tuple(new_hs), tuple(new_cs)

    h0 = tuple(jnp.zeros((Bt, H), jnp.float32) for _ in range(L))
    c0 = tuple(jnp.zeros((Bt, H), jnp.float32) for _ in range(L))
    h_fin, _ = jax.lax.fori_loop(0, S, step, (h0, c0), unroll=True)

    # ---- deferred output head: one lane-dense matmul over all timesteps ----
    hseq = hseq_ref[...]                                           # (S, Bt, H)
    out_sbf = jnp.tanh(
        jnp.dot(hseq.reshape(S * Bt, H), wlin_ref[...],
                preferred_element_type=jnp.float32)
        + blin_ref[...]).reshape(S, Bt, F)
    for b in range(Bt):                   # static loop; emit (Bt, S, F) directly
        out_ref[b] = out_sbf[:, b, :]

    # ---- prediction head on the final hidden state of every layer (h_t) ----
    h_stack = jnp.concatenate([h.reshape(1, Bt, H) for h in h_fin], axis=0)
    pred_ref[...] = jnp.tanh(
        jnp.dot(h_stack.reshape(L * Bt, H), wpred_ref[...],
                preferred_element_type=jnp.float32)
        + bpred_ref[...]).reshape(L, Bt, S)


# ---------------------------------------------------------------------------- wrapper
@functools.partial(jax.jit, static_argnames=("sequence", "pred"))
def decoder_forward(z, params, *, sequence, pred=True):
    """z: (B, 1, H) latent (PyTorch batch_first). Returns (out, pred_out) like the module."""
    wih, whh, bih, bhh, wlin, blin, wpred, bpred = params
    B, _, H = z.shape
    L = wih.shape[0]
    F = wlin.shape[0]
    S = sequence
    f32 = jnp.float32

    # Dot-friendly layouts + folded bias (done once by XLA, outside the kernel).
    wih_t = jnp.transpose(wih, (0, 2, 1)).astype(f32)    # (L, H, 4H)
    whh_t = jnp.transpose(whh, (0, 2, 1)).astype(f32)    # (L, H, 4H)
    bias = (bih + bhh).astype(f32)                       # (L, 1, 4H)
    wlin_t = wlin.T.astype(f32)                          # (H, F)
    wpred_t = wpred.T.astype(f32)                        # (H, S)
    z2d = z[:, 0, :].astype(f32)                         # repeated latent -> (B, H)

    bt = B if B <= 8 else 8                              # batch tile (megacore shard)
    grid = (pl.cdiv(B, bt),)

    out, pred_lbs = pl.pallas_call(
        decoder_kernel,
        out_shape=(jax.ShapeDtypeStruct((B, S, F), f32),
                   jax.ShapeDtypeStruct((L, B, S), f32)),
        grid=grid,
        in_specs=[
            pl.BlockSpec((bt, H), lambda b: (b, 0)),              # z
            pl.BlockSpec((L, H, 4 * H), lambda b: (0, 0, 0)),     # W_ih^T
            pl.BlockSpec((L, H, 4 * H), lambda b: (0, 0, 0)),     # W_hh^T
            pl.BlockSpec((L, 1, 4 * H), lambda b: (0, 0, 0)),     # folded bias
            pl.BlockSpec((H, F), lambda b: (0, 0)),               # W_lin^T
            pl.BlockSpec((1, F), lambda b: (0, 0)),               # b_lin
            pl.BlockSpec((H, S), lambda b: (0, 0)),               # W_pred^T
            pl.BlockSpec((1, S), lambda b: (0, 0)),               # b_pred
        ],
        out_specs=(
            pl.BlockSpec((bt, S, F), lambda b: (b, 0, 0)),
            pl.BlockSpec((L, bt, S), lambda b: (0, b, 0)),
        ),
        scratch_shapes=[pltpu.VMEM((S, bt, H), f32)],
        compiler_params=pltpu.CompilerParams(
            dimension_semantics=("parallel",)),
    )(z2d, wih_t, whh_t, bias, wlin_t, blin.astype(f32), wpred_t,
      bpred.astype(f32))

    if pred:
        return out, jnp.squeeze(pred_lbs)                # torch .squeeze() semantics
    return out


# ----------------------------------------------------------------- deterministic init
def init_params(key, hidden, num_layers, sequence, out_features):
    k = 1.0 / jnp.sqrt(hidden)
    keys = jax.random.split(key, 8)
    u = lambda kk, shape: jax.random.uniform(kk, shape, jnp.float32, -k, k)
    wih = u(keys[0], (num_layers, 4 * hidden, hidden))
    whh = u(keys[1], (num_layers, 4 * hidden, hidden))
    bih = u(keys[2], (num_layers, 1, 4 * hidden))
    bhh = u(keys[3], (num_layers, 1, 4 * hidden))
    wlin = u(keys[4], (out_features, hidden))
    blin = u(keys[5], (1, out_features))
    wpred = u(keys[6], (sequence, hidden))
    bpred = u(keys[7], (1, sequence))
    return wih, whh, bih, bhh, wlin, blin, wpred, bpred


# ------------------------------------------------------------------- pure-JAX reference
def reference_forward(z, params, *, sequence):
    wih, whh, bih, bhh, wlin, blin, wpred, bpred = params
    B, _, H = z.shape
    L = wih.shape[0]
    x_seq = jnp.repeat(z, sequence, axis=1)              # (B, S, H)
    hs = [jnp.zeros((B, H), jnp.float32) for _ in range(L)]
    cs = [jnp.zeros((B, H), jnp.float32) for _ in range(L)]
    outs = []
    for t in range(sequence):
        x = x_seq[:, t, :]
        for l in range(L):
            gates = x @ wih[l].T + bih[l] + hs[l] @ whh[l].T + bhh[l]
            i_g, f_g, g_g, o_g = jnp.split(gates, 4, axis=-1)
            i_g, f_g, o_g = map(jax.nn.sigmoid, (i_g, f_g, o_g))
            g_g = jnp.tanh(g_g)
            cs[l] = f_g * cs[l] + i_g * g_g
            hs[l] = o_g * jnp.tanh(cs[l])
            x = hs[l]
        outs.append(x)
    output = jnp.stack(outs, axis=1)                     # (B, S, H)
    h_t = jnp.stack(hs, axis=0)                          # (L, B, H)
    out1 = jnp.tanh(output @ wlin.T + blin)
    out2 = jnp.tanh(jnp.squeeze(h_t @ wpred.T + bpred))
    return out1, out2


# -------------------------------------------------------------------------------- main
if __name__ == "__main__":
    key = jax.random.PRNGKey(0)
    configs = [
        # (batch, hidden_units, sequence, out_features, num_layers)
        (2, 32, 8, 4, 1),
        (4, 32, 8, 4, 2),     # exercises the fused multi-layer path
    ]
    for (B, H, S, F, L) in configs:
        key, kz, kp = jax.random.split(key, 3)
        z = jax.random.normal(kz, (B, 1, H), jnp.float32)
        params = init_params(kp, H, L, S, F)

        out, pred_out = decoder_forward(z, params, sequence=S, pred=True)
        out, pred_out = jax.block_until_ready((out, pred_out))

        ref_out, ref_pred = reference_forward(z, params, sequence=S)
        assert out.shape == (B, S, F)
        assert pred_out.shape == ref_pred.shape
        assert jnp.allclose(out, ref_out, atol=1e-5, rtol=1e-5)
        assert jnp.allclose(pred_out, ref_pred, atol=1e-5, rtol=1e-5)

    print("KERNEL_OK")
</pallas_src>

<mosaic_0001>
module attributes {stable_mosaic.version = 11 : i64} {
  func.func @decoder_kernel(%arg0: i32, %arg1: memref<2x32xf32, #tpu.memory_space<vmem>>, %arg2: memref<1x32x128xf32, #tpu.memory_space<vmem>>, %arg3: memref<1x32x128xf32, #tpu.memory_space<vmem>>, %arg4: memref<1x1x128xf32, #tpu.memory_space<vmem>>, %arg5: memref<32x4xf32, #tpu.memory_space<vmem>>, %arg6: memref<1x4xf32, #tpu.memory_space<vmem>>, %arg7: memref<32x8xf32, #tpu.memory_space<vmem>>, %arg8: memref<1x8xf32, #tpu.memory_space<vmem>>, %arg9: memref<2x8x4xf32, #tpu.memory_space<vmem>>, %arg10: memref<1x2x8xf32, #tpu.memory_space<vmem>>, %arg11: memref<8x2x32xf32, #tpu.memory_space<vmem>>) attributes {dimension_semantics = [#tpu.dimension_semantics<parallel>], iteration_bounds = array<i64: 1>, scalar_prefetch = 0 : i64, scratch_operands = 1 : i64, tpu.core_type = #tpu.core_type<tc>, window_params = [{transform_indices = @transform_0, window_bounds = array<i64: 2, 32>}, {pipeline_mode = #tpu.pipeline_mode<synchronous>, transform_indices = @transform_1, window_bounds = array<i64: 1, 32, 128>}, {pipeline_mode = #tpu.pipeline_mode<synchronous>, transform_indices = @transform_2, window_bounds = array<i64: 1, 32, 128>}, {pipeline_mode = #tpu.pipeline_mode<synchronous>, transform_indices = @transform_3, window_bounds = array<i64: 1, 1, 128>}, {pipeline_mode = #tpu.pipeline_mode<synchronous>, transform_indices = @transform_4, window_bounds = array<i64: 32, 4>}, {pipeline_mode = #tpu.pipeline_mode<synchronous>, transform_indices = @transform_5, window_bounds = array<i64: 1, 4>}, {pipeline_mode = #tpu.pipeline_mode<synchronous>, transform_indices = @transform_6, window_bounds = array<i64: 32, 8>}, {pipeline_mode = #tpu.pipeline_mode<synchronous>, transform_indices = @transform_7, window_bounds = array<i64: 1, 8>}, {transform_indices = @transform_8, window_bounds = array<i64: 2, 8, 4>}, {transform_indices = @transform_9, window_bounds = array<i64: 1, 2, 8>}]} {
    %c0 = arith.constant 0 : index
    %c0_0 = arith.constant 0 : index
    %0 = vector.load %arg1[%c0, %c0_0] : memref<2x32xf32, #tpu.memory_space<vmem>>, vector<2x32xf32>
    %c0_1 = arith.constant 0 : index
    %c0_2 = arith.constant 0 : index
    %c0_3 = arith.constant 0 : index
    %1 = vector.load %arg3[%c0_1, %c0_2, %c0_3] : memref<1x32x128xf32, #tpu.memory_space<vmem>>, vector<1x32x128xf32>
    %2 = vector.shape_cast %1 : vector<1x32x128xf32> to vector<32x128xf32>
    %c0_4 = arith.constant 0 : index
    %c0_5 = arith.constant 0 : index
    %c0_6 = arith.constant 0 : index
    %3 = vector.load %arg2[%c0_4, %c0_5, %c0_6] : memref<1x32x128xf32, #tpu.memory_space<vmem>>, vector<1x32x128xf32>
    %4 = vector.shape_cast %3 : vector<1x32x128xf32> to vector<32x128xf32>
    %cst = arith.constant dense<0.000000e+00> : vector<2x128xf32>
    %5 = tpu.matmul %0, %4, %cst {dimension_numbers = #tpu.dot_dimension_numbers<[1], [0], [0], [1], [0, 0, 1, 1], [], []>} : vector<2x32xf32>, vector<32x128xf32>, vector<2x128xf32> -> vector<2x128xf32>
    %c0_7 = arith.constant 0 : index
    %c0_8 = arith.constant 0 : index
    %c0_9 = arith.constant 0 : index
    %6 = vector.load %arg4[%c0_7, %c0_8, %c0_9] : memref<1x1x128xf32, #tpu.memory_space<vmem>>, vector<1x1x128xf32>
    %7 = vector.shape_cast %6 : vector<1x1x128xf32> to vector<1x128xf32>
    %8 = vector.broadcast %7 : vector<1x128xf32> to vector<2x128xf32>
    %9 = arith.addf %5, %8 : vector<2x128xf32>
    %cst_10 = arith.constant 0.000000e+00 : f32
    %10 = vector.broadcast %cst_10 : f32 to vector<2x32xf32>
    %cst_11 = arith.constant 0.000000e+00 : f32
    %11 = vector.broadcast %cst_11 : f32 to vector<2x32xf32>
    %c0_i32 = arith.constant 0 : i32
    %cst_12 = arith.constant dense<0.000000e+00> : vector<2x128xf32>
    %12 = tpu.matmul %10, %2, %cst_12 {dimension_numbers = #tpu.dot_dimension_numbers<[1], [0], [0], [1], [0, 0, 1, 1], [], []>} : vector<2x32xf32>, vector<32x128xf32>, vector<2x128xf32> -> vector<2x128xf32>
    %13 = arith.addf %9, %12 : vector<2x128xf32>
    %14 = vector.extract_strided_slice %13 {offsets = [0, 0], sizes = [2, 32], strides = [1, 1]} : vector<2x128xf32> to vector<2x32xf32>
    %15 = arith.negf %14 : vector<2x32xf32>
    %16 = math.exp %15 : vector<2x32xf32>
    %cst_13 = arith.constant 1.000000e+00 : f32
    %17 = vector.broadcast %cst_13 : f32 to vector<2x32xf32>
    %18 = arith.addf %17, %16 : vector<2x32xf32>
    %19 = arith.divf %17, %18 : vector<2x32xf32>
    %20 = vector.extract_strided_slice %13 {offsets = [0, 32], sizes = [2, 32], strides = [1, 1]} : vector<2x128xf32> to vector<2x32xf32>
    %21 = arith.negf %20 : vector<2x32xf32>
    %22 = math.exp %21 : vector<2x32xf32>
    %cst_14 = arith.constant 1.000000e+00 : f32
    %23 = vector.broadcast %cst_14 : f32 to vector<2x32xf32>
    %24 = arith.addf %23, %22 : vector<2x32xf32>
    %25 = arith.divf %23, %24 : vector<2x32xf32>
    %26 = vector.extract_strided_slice %13 {offsets = [0, 64], sizes = [2, 32], strides = [1, 1]} : vector<2x128xf32> to vector<2x32xf32>
    %27 = math.tanh %26 : vector<2x32xf32>
    %28 = vector.extract_strided_slice %13 {offsets = [0, 96], sizes = [2, 32], strides = [1, 1]} : vector<2x128xf32> to vector<2x32xf32>
    %29 = arith.negf %28 : vector<2x32xf32>
    %30 = math.exp %29 : vector<2x32xf32>
    %cst_15 = arith.constant 1.000000e+00 : f32
    %31 = vector.broadcast %cst_15 : f32 to vector<2x32xf32>
    %32 = arith.addf %31, %30 : vector<2x32xf32>
    %33 = arith.divf %31, %32 : vector<2x32xf32>
    %34 = arith.mulf %25, %11 : vector<2x32xf32>
    %35 = arith.mulf %19, %27 : vector<2x32xf32>
    %36 = arith.addf %34, %35 : vector<2x32xf32>
    %37 = math.tanh %36 : vector<2x32xf32>
    %38 = arith.mulf %33, %37 : vector<2x32xf32>
    %39 = arith.index_cast %c0_i32 : i32 to index
    %c0_16 = arith.constant 0 : index
    %c0_17 = arith.constant 0 : index
    %40 = vector.load %arg11[%39, %c0_16, %c0_17] : memref<8x2x32xf32, #tpu.memory_space<vmem>>, vector<1x2x32xf32>
    %41 = vector.shape_cast %40 : vector<1x2x32xf32> to vector<2x32xf32>
    %42 = vector.shape_cast %38 : vector<2x32xf32> to vector<1x2x32xf32>
    tpu.vector_store %arg11[%39, %c0_16, %c0_17], %42 {strides = array<i32>} : memref<8x2x32xf32, #tpu.memory_space<vmem>>, vector<1x2x32xf32>,
    %c1_i32 = arith.constant 1 : i32
    %cst_18 = arith.constant dense<0.000000e+00> : vector<2x128xf32>
    %43 = tpu.matmul %38, %2, %cst_18 {dimension_numbers = #tpu.dot_dimension_numbers<[1], [0], [0], [1], [0, 0, 1, 1], [], []>} : vector<2x32xf32>, vector<32x128xf32>, vector<2x128xf32> -> vector<2x128xf32>
    %44 = arith.addf %9, %43 : vector<2x128xf32>
    %45 = vector.extract_strided_slice %44 {offsets = [0, 0], sizes = [2, 32], strides = [1, 1]} : vector<2x128xf32> to vector<2x32xf32>
    %46 = arith.negf %45 : vector<2x32xf32>
    %47 = math.exp %46 : vector<2x32xf32>
    %cst_19 = arith.constant 1.000000e+00 : f32
    %48 = vector.broadcast %cst_19 : f32 to vector<2x32xf32>
    %49 = arith.addf %48, %47 : vector<2x32xf32>
    %50 = arith.divf %48, %49 : vector<2x32xf32>
    %51 = vector.extract_strided_slice %44 {offsets = [0, 32], sizes = [2, 32], strides = [1, 1]} : vector<2x128xf32> to vector<2x32xf32>
    %52 = arith.negf %51 : vector<2x32xf32>
    %53 = math.exp %52 : vector<2x32xf32>
    %cst_20 = arith.constant 1.000000e+00 : f32
    %54 = vector.broadcast %cst_20 : f32 to vector<2x32xf32>
    %55 = arith.addf %54, %53 : vector<2x32xf32>
    %56 = arith.divf %54, %55 : vector<2x32xf32>
    %57 = vector.extract_strided_slice %44 {offsets = [0, 64], sizes = [2, 32], strides = [1, 1]} : vector<2x128xf32> to vector<2x32xf32>
    %58 = math.tanh %57 : vector<2x32xf32>
    %59 = vector.extract_strided_slice %44 {offsets = [0, 96], sizes = [2, 32], strides = [1, 1]} : vector<2x128xf32> to vector<2x32xf32>
    %60 = arith.negf %59 : vector<2x32xf32>
    %61 = math.exp %60 : vector<2x32xf32>
    %cst_21 = arith.constant 1.000000e+00 : f32
    %62 = vector.broadcast %cst_21 : f32 to vector<2x32xf32>
    %63 = arith.addf %62, %61 : vector<2x32xf32>
    %64 = arith.divf %62, %63 : vector<2x32xf32>
    %65 = arith.mulf %56, %36 : vector<2x32xf32>
    %66 = arith.mulf %50, %58 : vector<2x32xf32>
    %67 = arith.addf %65, %66 : vector<2x32xf32>
    %68 = math.tanh %67 : vector<2x32xf32>
    %69 = arith.mulf %64, %68 : vector<2x32xf32>
    %70 = arith.index_cast %c1_i32 : i32 to index
    %c0_22 = arith.constant 0 : index
    %c0_23 = arith.constant 0 : index
    %71 = vector.load %arg11[%70, %c0_22, %c0_23] : memref<8x2x32xf32, #tpu.memory_space<vmem>>, vector<1x2x32xf32>
    %72 = vector.shape_cast %71 : vector<1x2x32xf32> to vector<2x32xf32>
    %73 = vector.shape_cast %69 : vector<2x32xf32> to vector<1x2x32xf32>
    tpu.vector_store %arg11[%70, %c0_22, %c0_23], %73 {strides = array<i32>} : memref<8x2x32xf32, #tpu.memory_space<vmem>>, vector<1x2x32xf32>,
    %c2_i32 = arith.constant 2 : i32
    %cst_24 = arith.constant dense<0.000000e+00> : vector<2x128xf32>
    %74 = tpu.matmul %69, %2, %cst_24 {dimension_numbers = #tpu.dot_dimension_numbers<[1], [0], [0], [1], [0, 0, 1, 1], [], []>} : vector<2x32xf32>, vector<32x128xf32>, vector<2x128xf32> -> vector<2x128xf32>
    %75 = arith.addf %9, %74 : vector<2x128xf32>
    %76 = vector.extract_strided_slice %75 {offsets = [0, 0], sizes = [2, 32], strides = [1, 1]} : vector<2x128xf32> to vector<2x32xf32>
    %77 = arith.negf %76 : vector<2x32xf32>
    %78 = math.exp %77 : vector<2x32xf32>
    %cst_25 = arith.constant 1.000000e+00 : f32
    %79 = vector.broadcast %cst_25 : f32 to vector<2x32xf32>
    %80 = arith.addf %79, %78 : vector<2x32xf32>
    %81 = arith.divf %79, %80 : vector<2x32xf32>
    %82 = vector.extract_strided_slice %75 {offsets = [0, 32], sizes = [2, 32], strides = [1, 1]} : vector<2x128xf32> to vector<2x32xf32>
    %83 = arith.negf %82 : vector<2x32xf32>
    %84 = math.exp %83 : vector<2x32xf32>
    %cst_26 = arith.constant 1.000000e+00 : f32
    %85 = vector.broadcast %cst_26 : f32 to vector<2x32xf32>
    %86 = arith.addf %85, %84 : vector<2x32xf32>
    %87 = arith.divf %85, %86 : vector<2x32xf32>
    %88 = vector.extract_strided_slice %75 {offsets = [0, 64], sizes = [2, 32], strides = [1, 1]} : vector<2x128xf32> to vector<2x32xf32>
    %89 = math.tanh %88 : vector<2x32xf32>
    %90 = vector.extract_strided_slice %75 {offsets = [0, 96], sizes = [2, 32], strides = [1, 1]} : vector<2x128xf32> to vector<2x32xf32>
    %91 = arith.negf %90 : vector<2x32xf32>
    %92 = math.exp %91 : vector<2x32xf32>
    %cst_27 = arith.constant 1.000000e+00 : f32
    %93 = vector.broadcast %cst_27 : f32 to vector<2x32xf32>
    %94 = arith.addf %93, %92 : vector<2x32xf32>
    %95 = arith.divf %93, %94 : vector<2x32xf32>
    %96 = arith.mulf %87, %67 : vector<2x32xf32>
    %97 = arith.mulf %81, %89 : vector<2x32xf32>
    %98 = arith.addf %96, %97 : vector<2x32xf32>
    %99 = math.tanh %98 : vector<2x32xf32>
    %100 = arith.mulf %95, %99 : vector<2x32xf32>
    %101 = arith.index_cast %c2_i32 : i32 to index
    %c0_28 = arith.constant 0 : index
    %c0_29 = arith.constant 0 : index
    %102 = vector.load %arg11[%101, %c0_28, %c0_29] : memref<8x2x32xf32, #tpu.memory_space<vmem>>, vector<1x2x32xf32>
    %103 = vector.shape_cast %102 : vector<1x2x32xf32> to vector<2x32xf32>
    %104 = vector.shape_cast %100 : vector<2x32xf32> to vector<1x2x32xf32>
    tpu.vector_store %arg11[%101, %c0_28, %c0_29], %104 {strides = array<i32>} : memref<8x2x32xf32, #tpu.memory_space<vmem>>, vector<1x2x32xf32>,
    %c3_i32 = arith.constant 3 : i32
    %cst_30 = arith.constant dense<0.000000e+00> : vector<2x128xf32>
    %105 = tpu.matmul %100, %2, %cst_30 {dimension_numbers = #tpu.dot_dimension_numbers<[1], [0], [0], [1], [0, 0, 1, 1], [], []>} : vector<2x32xf32>, vector<32x128xf32>, vector<2x128xf32> -> vector<2x128xf32>
    %106 = arith.addf %9, %105 : vector<2x128xf32>
    %107 = vector.extract_strided_slice %106 {offsets = [0, 0], sizes = [2, 32], strides = [1, 1]} : vector<2x128xf32> to vector<2x32xf32>
    %108 = arith.negf %107 : vector<2x32xf32>
    %109 = math.exp %108 : vector<2x32xf32>
    %cst_31 = arith.constant 1.000000e+00 : f32
    %110 = vector.broadcast %cst_31 : f32 to vector<2x32xf32>
    %111 = arith.addf %110, %109 : vector<2x32xf32>
    %112 = arith.divf %110, %111 : vector<2x32xf32>
    %113 = vector.extract_strided_slice %106 {offsets = [0, 32], sizes = [2, 32], strides = [1, 1]} : vector<2x128xf32> to vector<2x32xf32>
    %114 = arith.negf %113 : vector<2x32xf32>
    %115 = math.exp %114 : vector<2x32xf32>
    %cst_32 = arith.constant 1.000000e+00 : f32
    %116 = vector.broadcast %cst_32 : f32 to vector<2x32xf32>
    %117 = arith.addf %116, %115 : vector<2x32xf32>
    %118 = arith.divf %116, %117 : vector<2x32xf32>
    %119 = vector.extract_strided_slice %106 {offsets = [0, 64], sizes = [2, 32], strides = [1, 1]} : vector<2x128xf32> to vector<2x32xf32>
    %120 = math.tanh %119 : vector<2x32xf32>
    %121 = vector.extract_strided_slice %106 {offsets = [0, 96], sizes = [2, 32], strides = [1, 1]} : vector<2x128xf32> to vector<2x32xf32>
    %122 = arith.negf %121 : vector<2x32xf32>
    %123 = math.exp %122 : vector<2x32xf32>
    %cst_33 = arith.constant 1.000000e+00 : f32
    %124 = vector.broadcast %cst_33 : f32 to vector<2x32xf32>
    %125 = arith.addf %124, %123 : vector<2x32xf32>
    %126 = arith.divf %124, %125 : vector<2x32xf32>
    %127 = arith.mulf %118, %98 : vector<2x32xf32>
    %128 = arith.mulf %112, %120 : vector<2x32xf32>
    %129 = arith.addf %127, %128 : vector<2x32xf32>
    %130 = math.tanh %129 : vector<2x32xf32>
    %131 = arith.mulf %126, %130 : vector<2x32xf32>
    %132 = arith.index_cast %c3_i32 : i32 to index
    %c0_34 = arith.constant 0 : index
    %c0_35 = arith.constant 0 : index
    %133 = vector.load %arg11[%132, %c0_34, %c0_35] : memref<8x2x32xf32, #tpu.memory_space<vmem>>, vector<1x2x32xf32>
    %134 = vector.shape_cast %133 : vector<1x2x32xf32> to vector<2x32xf32>
    %135 = vector.shape_cast %131 : vector<2x32xf32> to vector<1x2x32xf32>
    tpu.vector_store %arg11[%132, %c0_34, %c0_35], %135 {strides = array<i32>} : memref<8x2x32xf32, #tpu.memory_space<vmem>>, vector<1x2x32xf32>,
    %c4_i32 = arith.constant 4 : i32
    %cst_36 = arith.constant dense<0.000000e+00> : vector<2x128xf32>
    %136 = tpu.matmul %131, %2, %cst_36 {dimension_numbers = #tpu.dot_dimension_numbers<[1], [0], [0], [1], [0, 0, 1, 1], [], []>} : vector<2x32xf32>, vector<32x128xf32>, vector<2x128xf32> -> vector<2x128xf32>
    %137 = arith.addf %9, %136 : vector<2x128xf32>
    %138 = vector.extract_strided_slice %137 {offsets = [0, 0], sizes = [2, 32], strides = [1, 1]} : vector<2x128xf32> to vector<2x32xf32>
    %139 = arith.negf %138 : vector<2x32xf32>
    %140 = math.exp %139 : vector<2x32xf32>
    %cst_37 = arith.constant 1.000000e+00 : f32
    %141 = vector.broadcast %cst_37 : f32 to vector<2x32xf32>
    %142 = arith.addf %141, %140 : vector<2x32xf32>
    %143 = arith.divf %141, %142 : vector<2x32xf32>
    %144 = vector.extract_strided_slice %137 {offsets = [0, 32], sizes = [2, 32], strides = [1, 1]} : vector<2x128xf32> to vector<2x32xf32>
    %145 = arith.negf %144 : vector<2x32xf32>
    %146 = math.exp %145 : vector<2x32xf32>
    %cst_38 = arith.constant 1.000000e+00 : f32
    %147 = vector.broadcast %cst_38 : f32 to vector<2x32xf32>
    %148 = arith.addf %147, %146 : vector<2x32xf32>
    %149 = arith.divf %147, %148 : vector<2x32xf32>
    %150 = vector.extract_strided_slice %137 {offsets = [0, 64], sizes = [2, 32], strides = [1, 1]} : vector<2x128xf32> to vector<2x32xf32>
    %151 = math.tanh %150 : vector<2x32xf32>
    %152 = vector.extract_strided_slice %137 {offsets = [0, 96], sizes = [2, 32], strides = [1, 1]} : vector<2x128xf32> to vector<2x32xf32>
    %153 = arith.negf %152 : vector<2x32xf32>
    %154 = math.exp %153 : vector<2x32xf32>
    %cst_39 = arith.constant 1.000000e+00 : f32
    %155 = vector.broadcast %cst_39 : f32 to vector<2x32xf32>
    %156 = arith.addf %155, %154 : vector<2x32xf32>
    %157 = arith.divf %155, %156 : vector<2x32xf32>
    %158 = arith.mulf %149, %129 : vector<2x32xf32>
    %159 = arith.mulf %143, %151 : vector<2x32xf32>
    %160 = arith.addf %158, %159 : vector<2x32xf32>
    %161 = math.tanh %160 : vector<2x32xf32>
    %162 = arith.mulf %157, %161 : vector<2x32xf32>
    %163 = arith.index_cast %c4_i32 : i32 to index
    %c0_40 = arith.constant 0 : index
    %c0_41 = arith.constant 0 : index
    %164 = vector.load %arg11[%163, %c0_40, %c0_41] : memref<8x2x32xf32, #tpu.memory_space<vmem>>, vector<1x2x32xf32>
    %165 = vector.shape_cast %164 : vector<1x2x32xf32> to vector<2x32xf32>
    %166 = vector.shape_cast %162 : vector<2x32xf32> to vector<1x2x32xf32>
    tpu.vector_store %arg11[%163, %c0_40, %c0_41], %166 {strides = array<i32>} : memref<8x2x32xf32, #tpu.memory_space<vmem>>, vector<1x2x32xf32>,
    %c5_i32 = arith.constant 5 : i32
    %cst_42 = arith.constant dense<0.000000e+00> : vector<2x128xf32>
    %167 = tpu.matmul %162, %2, %cst_42 {dimension_numbers = #tpu.dot_dimension_numbers<[1], [0], [0], [1], [0, 0, 1, 1], [], []>} : vector<2x32xf32>, vector<32x128xf32>, vector<2x128xf32> -> vector<2x128xf32>
    %168 = arith.addf %9, %167 : vector<2x128xf32>
    %169 = vector.extract_strided_slice %168 {offsets = [0, 0], sizes = [2, 32], strides = [1, 1]} : vector<2x128xf32> to vector<2x32xf32>
    %170 = arith.negf %169 : vector<2x32xf32>
    %171 = math.exp %170 : vector<2x32xf32>
    %cst_43 = arith.constant 1.000000e+00 : f32
    %172 = vector.broadcast %cst_43 : f32 to vector<2x32xf32>
    %173 = arith.addf %172, %171 : vector<2x32xf32>
    %174 = arith.divf %172, %173 : vector<2x32xf32>
    %175 = vector.extract_strided_slice %168 {offsets = [0, 32], sizes = [2, 32], strides = [1, 1]} : vector<2x128xf32> to vector<2x32xf32>
    %176 = arith.negf %175 : vector<2x32xf32>
    %177 = math.exp %176 : vector<2x32xf32>
    %cst_44 = arith.constant 1.000000e+00 : f32
    %178 = vector.broadcast %cst_44 : f32 to vector<2x32xf32>
    %179 = arith.addf %178, %177 : vector<2x32xf32>
    %180 = arith.divf %178, %179 : vector<2x32xf32>
    %181 = vector.extract_strided_slice %168 {offsets = [0, 64], sizes = [2, 32], strides = [1, 1]} : vector<2x128xf32> to vector<2x32xf32>
    %182 = math.tanh %181 : vector<2x32xf32>
    %183 = vector.extract_strided_slice %168 {offsets = [0, 96], sizes = [2, 32], strides = [1, 1]} : vector<2x128xf32> to vector<2x32xf32>
    %184 = arith.negf %183 : vector<2x32xf32>
    %185 = math.exp %184 : vector<2x32xf32>
    %cst_45 = arith.constant 1.000000e+00 : f32
    %186 = vector.broadcast %cst_45 : f32 to vector<2x32xf32>
    %187 = arith.addf %186, %185 : vector<2x32xf32>
    %188 = arith.divf %186, %187 : vector<2x32xf32>
    %189 = arith.mulf %180, %160 : vector<2x32xf32>
    %190 = arith.mulf %174, %182 : vector<2x32xf32>
    %191 = arith.addf %189, %190 : vector<2x32xf32>
    %192 = math.tanh %191 : vector<2x32xf32>
    %193 = arith.mulf %188, %192 : vector<2x32xf32>
    %194 = arith.index_cast %c5_i32 : i32 to index
    %c0_46 = arith.constant 0 : index
    %c0_47 = arith.constant 0 : index
    %195 = vector.load %arg11[%194, %c0_46, %c0_47] : memref<8x2x32xf32, #tpu.memory_space<vmem>>, vector<1x2x32xf32>
    %196 = vector.shape_cast %195 : vector<1x2x32xf32> to vector<2x32xf32>
    %197 = vector.shape_cast %193 : vector<2x32xf32> to vector<1x2x32xf32>
    tpu.vector_store %arg11[%194, %c0_46, %c0_47], %197 {strides = array<i32>} : memref<8x2x32xf32, #tpu.memory_space<vmem>>, vector<1x2x32xf32>,
    %c6_i32 = arith.constant 6 : i32
    %cst_48 = arith.constant dense<0.000000e+00> : vector<2x128xf32>
    %198 = tpu.matmul %193, %2, %cst_48 {dimension_numbers = #tpu.dot_dimension_numbers<[1], [0], [0], [1], [0, 0, 1, 1], [], []>} : vector<2x32xf32>, vector<32x128xf32>, vector<2x128xf32> -> vector<2x128xf32>
    %199 = arith.addf %9, %198 : vector<2x128xf32>
    %200 = vector.extract_strided_slice %199 {offsets = [0, 0], sizes = [2, 32], strides = [1, 1]} : vector<2x128xf32> to vector<2x32xf32>
    %201 = arith.negf %200 : vector<2x32xf32>
    %202 = math.exp %201 : vector<2x32xf32>
    %cst_49 = arith.constant 1.000000e+00 : f32
    %203 = vector.broadcast %cst_49 : f32 to vector<2x32xf32>
    %204 = arith.addf %203, %202 : vector<2x32xf32>
    %205 = arith.divf %203, %204 : vector<2x32xf32>
    %206 = vector.extract_strided_slice %199 {offsets = [0, 32], sizes = [2, 32], strides = [1, 1]} : vector<2x128xf32> to vector<2x32xf32>
    %207 = arith.negf %206 : vector<2x32xf32>
    %208 = math.exp %207 : vector<2x32xf32>
    %cst_50 = arith.constant 1.000000e+00 : f32
    %209 = vector.broadcast %cst_50 : f32 to vector<2x32xf32>
    %210 = arith.addf %209, %208 : vector<2x32xf32>
    %211 = arith.divf %209, %210 : vector<2x32xf32>
    %212 = vector.extract_strided_slice %199 {offsets = [0, 64], sizes = [2, 32], strides = [1, 1]} : vector<2x128xf32> to vector<2x32xf32>
    %213 = math.tanh %212 : vector<2x32xf32>
    %214 = vector.extract_strided_slice %199 {offsets = [0, 96], sizes = [2, 32], strides = [1, 1]} : vector<2x128xf32> to vector<2x32xf32>
    %215 = arith.negf %214 : vector<2x32xf32>
    %216 = math.exp %215 : vector<2x32xf32>
    %cst_51 = arith.constant 1.000000e+00 : f32
    %217 = vector.broadcast %cst_51 : f32 to vector<2x32xf32>
    %218 = arith.addf %217, %216 : vector<2x32xf32>
    %219 = arith.divf %217, %218 : vector<2x32xf32>
    %220 = arith.mulf %211, %191 : vector<2x32xf32>
    %221 = arith.mulf %205, %213 : vector<2x32xf32>
    %222 = arith.addf %220, %221 : vector<2x32xf32>
    %223 = math.tanh %222 : vector<2x32xf32>
    %224 = arith.mulf %219, %223 : vector<2x32xf32>
    %225 = arith.index_cast %c6_i32 : i32 to index
    %c0_52 = arith.constant 0 : index
    %c0_53 = arith.constant 0 : index
    %226 = vector.load %arg11[%225, %c0_52, %c0_53] : memref<8x2x32xf32, #tpu.memory_space<vmem>>, vector<1x2x32xf32>
    %227 = vector.shape_cast %226 : vector<1x2x32xf32> to vector<2x32xf32>
    %228 = vector.shape_cast %224 : vector<2x32xf32> to vector<1x2x32xf32>
    tpu.vector_store %arg11[%225, %c0_52, %c0_53], %228 {strides = array<i32>} : memref<8x2x32xf32, #tpu.memory_space<vmem>>, vector<1x2x32xf32>,
    %c7_i32 = arith.constant 7 : i32
    %cst_54 = arith.constant dense<0.000000e+00> : vector<2x128xf32>
    %229 = tpu.matmul %224, %2, %cst_54 {dimension_numbers = #tpu.dot_dimension_numbers<[1], [0], [0], [1], [0, 0, 1, 1], [], []>} : vector<2x32xf32>, vector<32x128xf32>, vector<2x128xf32> -> vector<2x128xf32>
    %230 = arith.addf %9, %229 : vector<2x128xf32>
    %231 = vector.extract_strided_slice %230 {offsets = [0, 0], sizes = [2, 32], strides = [1, 1]} : vector<2x128xf32> to vector<2x32xf32>
    %232 = arith.negf %231 : vector<2x32xf32>
    %233 = math.exp %232 : vector<2x32xf32>
    %cst_55 = arith.constant 1.000000e+00 : f32
    %234 = vector.broadcast %cst_55 : f32 to vector<2x32xf32>
    %235 = arith.addf %234, %233 : vector<2x32xf32>
    %236 = arith.divf %234, %235 : vector<2x32xf32>
    %237 = vector.extract_strided_slice %230 {offsets = [0, 32], sizes = [2, 32], strides = [1, 1]} : vector<2x128xf32> to vector<2x32xf32>
    %238 = arith.negf %237 : vector<2x32xf32>
    %239 = math.exp %238 : vector<2x32xf32>
    %cst_56 = arith.constant 1.000000e+00 : f32
    %240 = vector.broadcast %cst_56 : f32 to vector<2x32xf32>
    %241 = arith.addf %240, %239 : vector<2x32xf32>
    %242 = arith.divf %240, %241 : vector<2x32xf32>
    %243 = vector.extract_strided_slice %230 {offsets = [0, 64], sizes = [2, 32], strides = [1, 1]} : vector<2x128xf32> to vector<2x32xf32>
    %244 = math.tanh %243 : vector<2x32xf32>
    %245 = vector.extract_strided_slice %230 {offsets = [0, 96], sizes = [2, 32], strides = [1, 1]} : vector<2x128xf32> to vector<2x32xf32>
    %246 = arith.negf %245 : vector<2x32xf32>
    %247 = math.exp %246 : vector<2x32xf32>
    %cst_57 = arith.constant 1.000000e+00 : f32
    %248 = vector.broadcast %cst_57 : f32 to vector<2x32xf32>
    %249 = arith.addf %248, %247 : vector<2x32xf32>
    %250 = arith.divf %248, %249 : vector<2x32xf32>
    %251 = arith.mulf %242, %222 : vector<2x32xf32>
    %252 = arith.mulf %236, %244 : vector<2x32xf32>
    %253 = arith.addf %251, %252 : vector<2x32xf32>
    %254 = math.tanh %253 : vector<2x32xf32>
    %255 = arith.mulf %250, %254 : vector<2x32xf32>
    %256 = arith.index_cast %c7_i32 : i32 to index
    %c0_58 = arith.constant 0 : index
    %c0_59 = arith.constant 0 : index
    %257 = vector.load %arg11[%256, %c0_58, %c0_59] : memref<8x2x32xf32, #tpu.memory_space<vmem>>, vector<1x2x32xf32>
    %258 = vector.shape_cast %257 : vector<1x2x32xf32> to vector<2x32xf32>
    %259 = vector.shape_cast %255 : vector<2x32xf32> to vector<1x2x32xf32>
    tpu.vector_store %arg11[%256, %c0_58, %c0_59], %259 {strides = array<i32>} : memref<8x2x32xf32, #tpu.memory_space<vmem>>, vector<1x2x32xf32>,
    %c8_i32 = arith.constant 8 : i32
    %c0_60 = arith.constant 0 : index
    %c0_61 = arith.constant 0 : index
    %c0_62 = arith.constant 0 : index
    %260 = vector.load %arg11[%c0_60, %c0_61, %c0_62] : memref<8x2x32xf32, #tpu.memory_space<vmem>>, vector<8x2x32xf32>
    %261 = vector.shape_cast %260 : vector<8x2x32xf32> to vector<16x32xf32>
    %c0_63 = arith.constant 0 : index
    %c0_64 = arith.constant 0 : index
    %262 = vector.load %arg5[%c0_63, %c0_64] : memref<32x4xf32, #tpu.memory_space<vmem>>, vector<32x4xf32>
    %cst_65 = arith.constant dense<0.000000e+00> : vector<16x4xf32>
    %263 = tpu.matmul %261, %262, %cst_65 {dimension_numbers = #tpu.dot_dimension_numbers<[1], [0], [0], [1], [0, 0, 1, 1], [], []>} : vector<16x32xf32>, vector<32x4xf32>, vector<16x4xf32> -> vector<16x4xf32>
    %c0_66 = arith.constant 0 : index
    %c0_67 = arith.constant 0 : index
    %264 = vector.load %arg6[%c0_66, %c0_67] : memref<1x4xf32, #tpu.memory_space<vmem>>, vector<1x4xf32>
    %265 = vector.broadcast %264 : vector<1x4xf32> to vector<16x4xf32>
    %266 = arith.addf %263, %265 : vector<16x4xf32>
    %267 = math.tanh %266 : vector<16x4xf32>
    %268 = vector.shape_cast %267 : vector<16x4xf32> to vector<8x2x4xf32>
    %269 = vector.extract_strided_slice %268 {offsets = [0, 0, 0], sizes = [8, 1, 4], strides = [1, 1, 1]} : vector<8x2x4xf32> to vector<8x1x4xf32>
    %270 = vector.shape_cast %269 : vector<8x1x4xf32> to vector<8x4xf32>
    %c0_68 = arith.constant 0 : index
    %c0_69 = arith.constant 0 : index
    %c0_70 = arith.constant 0 : index
    %271 = vector.load %arg9[%c0_68, %c0_69, %c0_70] : memref<2x8x4xf32, #tpu.memory_space<vmem>>, vector<1x8x4xf32>
    %272 = vector.shape_cast %271 : vector<1x8x4xf32> to vector<8x4xf32>
    %273 = vector.shape_cast %270 : vector<8x4xf32> to vector<1x8x4xf32>
    tpu.vector_store %arg9[%c0_68, %c0_69, %c0_70], %273 {strides = array<i32>} : memref<2x8x4xf32, #tpu.memory_space<vmem>>, vector<1x8x4xf32>,
    %274 = vector.extract_strided_slice %268 {offsets = [0, 1, 0], sizes = [8, 1, 4], strides = [1, 1, 1]} : vector<8x2x4xf32> to vector<8x1x4xf32>
    %275 = vector.shape_cast %274 : vector<8x1x4xf32> to vector<8x4xf32>
    %c1 = arith.constant 1 : index
    %c0_71 = arith.constant 0 : index
    %c0_72 = arith.constant 0 : index
    %276 = vector.load %arg9[%c1, %c0_71, %c0_72] : memref<2x8x4xf32, #tpu.memory_space<vmem>>, vector<1x8x4xf32>
    %277 = vector.shape_cast %276 : vector<1x8x4xf32> to vector<8x4xf32>
    %278 = vector.shape_cast %275 : vector<8x4xf32> to vector<1x8x4xf32>
    tpu.vector_store %arg9[%c1, %c0_71, %c0_72], %278 {strides = array<i32>} : memref<2x8x4xf32, #tpu.memory_space<vmem>>, vector<1x8x4xf32>,
    %279 = vector.shape_cast %255 : vector<2x32xf32> to vector<1x2x32xf32>
    %280 = vector.shape_cast %279 : vector<1x2x32xf32> to vector<2x32xf32>
    %c0_73 = arith.constant 0 : index
    %c0_74 = arith.constant 0 : index
    %281 = vector.load %arg7[%c0_73, %c0_74] : memref<32x8xf32, #tpu.memory_space<vmem>>, vector<32x8xf32>
    %cst_75 = arith.constant dense<0.000000e+00> : vector<2x8xf32>
    %282 = tpu.matmul %280, %281, %cst_75 {dimension_numbers = #tpu.dot_dimension_numbers<[1], [0], [0], [1], [0, 0, 1, 1], [], []>} : vector<2x32xf32>, vector<32x8xf32>, vector<2x8xf32> -> vector<2x8xf32>
    %c0_76 = arith.constant 0 : index
    %c0_77 = arith.constant 0 : index
    %283 = vector.load %arg8[%c0_76, %c0_77] : memref<1x8xf32, #tpu.memory_space<vmem>>, vector<1x8xf32>
    %284 = vector.broadcast %283 : vector<1x8xf32> to vector<2x8xf32>
    %285 = arith.addf %282, %284 : vector<2x8xf32>
    %286 = math.tanh %285 : vector<2x8xf32>
    %287 = vector.shape_cast %286 : vector<2x8xf32> to vector<1x2x8xf32>
    %c0_78 = arith.constant 0 : index
    %c0_79 = arith.constant 0 : index
    %c0_80 = arith.constant 0 : index
    %288 = vector.load %arg10[%c0_78, %c0_79, %c0_80] : memref<1x2x8xf32, #tpu.memory_space<vmem>>, vector<1x2x8xf32>
    tpu.vector_store %arg10[%c0_78, %c0_79, %c0_80], %287 {strides = array<i32>} : memref<1x2x8xf32, #tpu.memory_space<vmem>>, vector<1x2x8xf32>,
    return
  }
  func.func @transform_0(%arg0: i32) -> (i32, i32) {
    %c0_i32 = arith.constant 0 : i32
    %c0_i32_0 = arith.constant 0 : i32
    return %arg0, %c0_i32 : i32, i32
  }
  func.func @transform_1(%arg0: i32) -> (i32, i32, i32) {
    %c0_i32 = arith.constant 0 : i32
    %c0_i32_0 = arith.constant 0 : i32
    %c0_i32_1 = arith.constant 0 : i32
    %c0_i32_2 = arith.constant 0 : i32
    return %c0_i32, %c0_i32_0, %c0_i32_1 : i32, i32, i32
  }
  func.func @transform_2(%arg0: i32) -> (i32, i32, i32) {
    %c0_i32 = arith.constant 0 : i32
    %c0_i32_0 = arith.constant 0 : i32
    %c0_i32_1 = arith.constant 0 : i32
    %c0_i32_2 = arith.constant 0 : i32
    return %c0_i32, %c0_i32_0, %c0_i32_1 : i32, i32, i32
  }
  func.func @transform_3(%arg0: i32) -> (i32, i32, i32) {
    %c0_i32 = arith.constant 0 : i32
    %c0_i32_0 = arith.constant 0 : i32
    %c0_i32_1 = arith.constant 0 : i32
    %c0_i32_2 = arith.constant 0 : i32
    return %c0_i32, %c0_i32_0, %c0_i32_1 : i32, i32, i32
  }
  func.func @transform_4(%arg0: i32) -> (i32, i32) {
    %c0_i32 = arith.constant 0 : i32
    %c0_i32_0 = arith.constant 0 : i32
    %c0_i32_1 = arith.constant 0 : i32
    return %c0_i32, %c0_i32_0 : i32, i32
  }
  func.func @transform_5(%arg0: i32) -> (i32, i32) {
    %c0_i32 = arith.constant 0 : i32
    %c0_i32_0 = arith.constant 0 : i32
    %c0_i32_1 = arith.constant 0 : i32
    return %c0_i32, %c0_i32_0 : i32, i32
  }
  func.func @transform_6(%arg0: i32) -> (i32, i32) {
    %c0_i32 = arith.constant 0 : i32
    %c0_i32_0 = arith.constant 0 : i32
    %c0_i32_1 = arith.constant 0 : i32
    return %c0_i32, %c0_i32_0 : i32, i32
  }
  func.func @transform_7(%arg0: i32) -> (i32, i32) {
    %c0_i32 = arith.constant 0 : i32
    %c0_i32_0 = arith.constant 0 : i32
    %c0_i32_1 = arith.constant 0 : i32
    return %c0_i32, %c0_i32_0 : i32, i32
  }
  func.func @transform_8(%arg0: i32) -> (i32, i32, i32) {
    %c0_i32 = arith.constant 0 : i32
    %c0_i32_0 = arith.constant 0 : i32
    %c0_i32_1 = arith.constant 0 : i32
    return %arg0, %c0_i32, %c0_i32_0 : i32, i32, i32
  }
  func.func @transform_9(%arg0: i32) -> (i32, i32, i32) {
    %c0_i32 = arith.constant 0 : i32
    %c0_i32_0 = arith.constant 0 : i32
    %c0_i32_1 = arith.constant 0 : i32
    return %c0_i32, %arg0, %c0_i32_0 : i32, i32, i32
  }
}

</mosaic_0001>

<llo_original>
// kernel: decoder_forward.1
$region0: #{decoder_forward.1}
  #allocation0 [shape = 'u32[]', space=smem, size = 0x4, offset = 0x4, fixed_abs, tag = 'smem constant byte address 0x4 - core index']
  #allocation1 [shape = 'u32[144,128]{1,0:T(1,128)}', space=vmem, size = 0x12000, scoped, tag = 'internal scratch']
  #allocation2 [shape = 'f32[8,2,32]{2,1,0:T(2,128)}', space=vmem, size = 0x2000, scoped, tag = 'scratch operand']
  %s0 = inlined_call_operand.vmem [shape: f32[2,32], index: 0, kind: input, shape index: {}]
  %s1 = inlined_call_operand.vmem [shape: f32[1,32,128], index: 1, kind: input, shape index: {}]
  %s2 = inlined_call_operand.vmem [shape: f32[1,32,128], index: 2, kind: input, shape index: {}]
  %s3 = inlined_call_operand.vmem [shape: f32[1,1,128], index: 3, kind: input, shape index: {}]
  %s4 = inlined_call_operand.vmem [shape: f32[32,4], index: 4, kind: input, shape index: {}]
  %s5 = inlined_call_operand.vmem [shape: f32[1,4], index: 5, kind: input, shape index: {}]
  %s6 = inlined_call_operand.vmem [shape: f32[32,8], index: 6, kind: input, shape index: {}]
  %s7 = inlined_call_operand.vmem [shape: f32[1,8], index: 7, kind: input, shape index: {}]
  %s8 = inlined_call_operand.vmem [shape: f32[2,8,4], index: 8, kind: output, shape index: {0}]
  %s9 = inlined_call_operand.hbm [shape: f32[1,2,8], index: 9, kind: output, shape index: {1}]
  %10 = xla_tuple %s8, %s9
  %s11 = sld [smem:[#allocation0]]
  $region50: #{decoder_forward.1} parent=0
    _
  %s13 = ssub.s32 1, %s11
  %s14 = scalar_select 0, %s13, %s11
  $region1: #{decoder_forward.1} parent=0
    #allocation3 [shape = 'u8[1024]{0}', space=vmem, size = 0x400, scoped, tag = 'output window, operand 1, single buffered']
    #allocation4 [shape = 's32[1]{0}', space=sflag, size = 0x4, scoped, tag = 'scoped memory for decoder_forward.1']
    %15 = vsyncpa [#allocation4], 0
    // Predicated region
    $region2: #{decoder_forward.1} parent=1 // pred_check
      _
    $region3: #{decoder_forward.1} parent=1 // pred_check_branch
      %17 = sbr.rel (0) target = $region5
    $region4: #{decoder_forward.1} parent=1 // pred_region
      _
    $region5: #{decoder_forward.1} parent=1 // pred_fallthru
      _
    // Predicated region
    $region6: #{decoder_forward.1} parent=1 // pred_check
      _
    $region7: #{decoder_forward.1} parent=1 // pred_check_branch
      %19 = sbr.rel (0) target = $region9
    $region8: #{decoder_forward.1} parent=1 // pred_region
      _
    $region9: #{decoder_forward.1} parent=1 // pred_fallthru
      _
    // Predicated region
    $region10: #{decoder_forward.1} parent=1 // pred_check
      _
    $region11: #{decoder_forward.1} parent=1 // pred_check_branch
      %21 = sbr.rel (0) target = $region13
    $region12: #{decoder_forward.1} parent=1 // pred_region
      _
    $region13: #{decoder_forward.1} parent=1 // pred_fallthru
      _
    // Predicated region
    $region14: #{decoder_forward.1} parent=1 // pred_check
      _
    $region15: #{decoder_forward.1} parent=1 // pred_check_branch
      %23 = sbr.rel (0) target = $region17
    $region16: #{decoder_forward.1} parent=1 // pred_region
      _
    $region17: #{decoder_forward.1} parent=1 // pred_fallthru
      _
    // Predicated region
    $region18: #{decoder_forward.1} parent=1 // pred_check
      _
    $region19: #{decoder_forward.1} parent=1 // pred_check_branch
      %25 = sbr.rel (0) target = $region21
    $region20: #{decoder_forward.1} parent=1 // pred_region
      _
    $region21: #{decoder_forward.1} parent=1 // pred_fallthru
      _
    // Predicated region
    $region22: #{decoder_forward.1} parent=1 // pred_check
      _
    $region23: #{decoder_forward.1} parent=1 // pred_check_branch
      %27 = sbr.rel (0) target = $region25
    $region24: #{decoder_forward.1} parent=1 // pred_region
      _
    $region25: #{decoder_forward.1} parent=1 // pred_fallthru
      _
    // Predicated region
    $region26: #{decoder_forward.1} parent=1 // pred_check
      _
    $region27: #{decoder_forward.1} parent=1 // pred_check_branch
      %29 = sbr.rel (0) target = $region29
    $region28: #{decoder_forward.1} parent=1 // pred_region
      _
    $region29: #{decoder_forward.1} parent=1 // pred_fallthru
      _
    // Predicated region
    $region30: #{decoder_forward.1} parent=1 // pred_check
      _
    $region31: #{decoder_forward.1} parent=1 // pred_check_branch
      %31 = sbr.rel (0) target = $region33
    $region32: #{decoder_forward.1} parent=1 // pred_region
      _
    $region33: #{decoder_forward.1} parent=1 // pred_fallthru
      _
    %v32 = vld [vmem:[%s0] sm:$0x3]
    %v33 = vld [vmem:[%s2] sm:$0xff]
    %v34 = vld [vmem:[%s2 + $0x8] sm:$0xff]
    %v35 = vld [vmem:[%s2 + $0x10] sm:$0xff]
    %v36 = vld [vmem:[%s2 + $0x18] sm:$0xff]
    %v37 = vld [vmem:[%s1] sm:$0xff]
    %v38 = vld [vmem:[%s1 + $0x8] sm:$0xff]
    %v39 = vld [vmem:[%s1 + $0x10] sm:$0xff]
    %v40 = vld [vmem:[%s1 + $0x18] sm:$0xff]
    %v41 = vld [vmem:[%s3] sm:$0x1]
    %v43 = vlaneseq
    %v44 = vshrl.u32 %v43, 7
    %v45 = vsub.s32 0, %v44
    %v46 = vrot.slane %v41, %v45
    %vm48 = vcmask 261120
    %v50 = vsel %vm48, %v32, 0
    %52 = vmatprep.subr.mxu0 0.0
    %53 = vmatpush1.msra.mxu0 %v37
    %54 = vmatprep.subr.mxu0 0.0
    %55 = vmatpush1.msra.mxu0 %v38
    %56 = vmatprep.subr.mxu0 0.0
    %57 = vmatpush1.msra.mxu0 %v39
    %58 = vmatprep.subr.mxu0 0.0
    %59 = vmatpush1.msra.mxu0 %v40
    %60 = vmatprep.subr.mxu0 0.0
    %61 = vmatpush1.msra.mxu0 0.0
    %62 = vmatprep.subr.mxu0 0.0
    %63 = vmatpush1.msra.mxu0 0.0
    %64 = vmatprep.subr.mxu0 0.0
    %65 = vmatpush1.msra.mxu0 0.0
    %66 = vmatprep.subr.mxu0 0.0
    %67 = vmatpush1.msra.mxu0 0.0
    %68 = vmatprep.subr.mxu0 0.0
    %69 = vmatpush1.msra.mxu0 0.0
    %70 = vmatprep.subr.mxu0 0.0
    %71 = vmatpush1.msra.mxu0 0.0
    %72 = vmatprep.subr.mxu0 0.0
    %73 = vmatpush1.msra.mxu0 0.0
    %74 = vmatprep.subr.mxu0 0.0
    %75 = vmatpush1.msra.mxu0 0.0
    %76 = vmatprep.subr.mxu0 0.0
    %77 = vmatpush1.msra.mxu0 0.0
    %78 = vmatprep.subr.mxu0 0.0
    %79 = vmatpush1.msra.mxu0 0.0
    %80 = vmatprep.subr.mxu0 0.0
    %81 = vmatpush1.msra.mxu0 0.0
    %82 = vmatprep.subr.mxu0 0.0
    %83 = vmatpush1.msra.mxu0 0.0
    %84 = vmatprep.subr.mxu0 0.0
    %85 = vmatpush1.msra.mxu0 0.0
    %86 = vmatprep.subr.mxu0 0.0
    %87 = vmatpush1.msra.mxu0 0.0
    %88 = vmatprep.subr.mxu0 0.0
    %89 = vmatpush1.msra.mxu0 0.0
    %90 = vmatprep.subr.mxu0 0.0
    %91 = vmatpush1.msra.mxu0 0.0
    %92 = vmatprep.subr.mxu0 0.0
    %93 = vmatpush1.msra.mxu0 0.0
    %94 = vmatprep.subr.mxu0 0.0
    %95 = vmatpush1.msra.mxu0 0.0
    %96 = vmatprep.subr.mxu0 0.0
    %97 = vmatpush1.msra.mxu0 0.0
    %98 = vmatprep.subr.mxu0 0.0
    %99 = vmatpush1.msra.mxu0 0.0
    %100 = vmatprep.subr.mxu0 0.0
    %101 = vmatpush1.msra.mxu0 0.0
    %102 = vmatprep.subr.mxu0 0.0
    %103 = vmatpush1.msra.mxu0 0.0
    %104 = vmatprep.subr.mxu0 0.0
    %105 = vmatpush1.msra.mxu0 0.0
    %106 = vmatprep.subr.mxu0 0.0
    %107 = vmatpush1.msra.mxu0 0.0
    %108 = vmatprep.subr.mxu0 0.0
    %109 = vmatpush1.msra.mxu0 0.0
    %110 = vmatprep.subr.mxu0 0.0
    %111 = vmatpush1.msra.mxu0 0.0
    %112 = vmatprep.subr.mxu0 0.0
    %113 = vmatpush1.msra.mxu0 0.0
    %114 = vmatprep.subr.mxu0 0.0
    %115 = vmatpush1.msra.mxu0 0.0
    %116 = vmatprep.mubr.f32.mxu0 0.0
    %117 = vmatmul.mubr.f32.gmra.mrb[0].mxu0 %v50
    %v118 = vpop.f32.mrb[0].mxu0
    %v119 = vadd.f32 %v46, %v118
    %v120 = vpop.f32.mrb[0].mxu0
    %121 = vdwg.mxu0
    %v123 = vsel %vm48, 0.0, 0
    %125 = vmatprep.subr.mxu0 0.0
    %126 = vmatpush1.msra.mxu0 %v33
    %127 = vmatprep.subr.mxu0 0.0
    %128 = vmatpush1.msra.mxu0 %v34
    %129 = vmatprep.subr.mxu0 0.0
    %130 = vmatpush1.msra.mxu0 %v35
    %131 = vmatprep.subr.mxu0 0.0
    %132 = vmatpush1.msra.mxu0 %v36
    %133 = vmatprep.subr.mxu0 0.0
    %134 = vmatpush1.msra.mxu0 0.0
    %135 = vmatprep.subr.mxu0 0.0
    %136 = vmatpush1.msra.mxu0 0.0
    %137 = vmatprep.subr.mxu0 0.0
    %138 = vmatpush1.msra.mxu0 0.0
    %139 = vmatprep.subr.mxu0 0.0
    %140 = vmatpush1.msra.mxu0 0.0
    %141 = vmatprep.subr.mxu0 0.0
    %142 = vmatpush1.msra.mxu0 0.0
    %143 = vmatprep.subr.mxu0 0.0
    %144 = vmatpush1.msra.mxu0 0.0
    %145 = vmatprep.subr.mxu0 0.0
    %146 = vmatpush1.msra.mxu0 0.0
    %147 = vmatprep.subr.mxu0 0.0
    %148 = vmatpush1.msra.mxu0 0.0
    %149 = vmatprep.subr.mxu0 0.0
    %150 = vmatpush1.msra.mxu0 0.0
    %151 = vmatprep.subr.mxu0 0.0
    %152 = vmatpush1.msra.mxu0 0.0
    %153 = vmatprep.subr.mxu0 0.0
    %154 = vmatpush1.msra.mxu0 0.0
    %155 = vmatprep.subr.mxu0 0.0
    %156 = vmatpush1.msra.mxu0 0.0
    %157 = vmatprep.subr.mxu0 0.0
    %158 = vmatpush1.msra.mxu0 0.0
    %159 = vmatprep.subr.mxu0 0.0
    %160 = vmatpush1.msra.mxu0 0.0
    %161 = vmatprep.subr.mxu0 0.0
    %162 = vmatpush1.msra.mxu0 0.0
    %163 = vmatprep.subr.mxu0 0.0
    %164 = vmatpush1.msra.mxu0 0.0
    %165 = vmatprep.subr.mxu0 0.0
    %166 = vmatpush1.msra.mxu0 0.0
    %167 = vmatprep.subr.mxu0 0.0
    %168 = vmatpush1.msra.mxu0 0.0
    %169 = vmatprep.subr.mxu0 0.0
    %170 = vmatpush1.msra.mxu0 0.0
    %171 = vmatprep.subr.mxu0 0.0
    %172 = vmatpush1.msra.mxu0 0.0
    %173 = vmatprep.subr.mxu0 0.0
    %174 = vmatpush1.msra.mxu0 0.0
    %175 = vmatprep.subr.mxu0 0.0
    %176 = vmatpush1.msra.mxu0 0.0
    %177 = vmatprep.subr.mxu0 0.0
    %178 = vmatpush1.msra.mxu0 0.0
    %179 = vmatprep.subr.mxu0 0.0
    %180 = vmatpush1.msra.mxu0 0.0
    %181 = vmatprep.subr.mxu0 0.0
    %182 = vmatpush1.msra.mxu0 0.0
    %183 = vmatprep.subr.mxu0 0.0
    %184 = vmatpush1.msra.mxu0 0.0
    %185 = vmatprep.subr.mxu0 0.0
    %186 = vmatpush1.msra.mxu0 0.0
    %187 = vmatprep.subr.mxu0 0.0
    %188 = vmatpush1.msra.mxu0 0.0
    %189 = vmatprep.mubr.f32.mxu0 0.0
    %190 = vmatmul.mubr.f32.gmra.mrb[0].mxu0 %v123
    %v191 = vpop.f32.mrb[0].mxu0
    %v192 = vadd.f32 0.0, %v191
    %v193 = vpop.f32.mrb[0].mxu0
    %194 = vdwg.mxu0
    %v195 = vadd.f32 %v119, %v192
    %v196 = vxor.u32 %v195, 2147483648
    %v197 = vmul.f32 %v196, 1.442695
    %v198 = vpow.pop %v197
    %v199 = vadd.f32 %v198, 1.0
    %v200 = vrcp.pop %v199
    %v201 = vmul.f32 1.0, %v200
    %v202 = vtanh.pop %v195
    %v203 = vmul.f32 %v201, 0.0
    %205 = vrot.lane.b32.xlu0 %v202, 64
    %v206 = vpop.permute.xlu0 %205
    %v208 = vmul.f32 %v201, %v206
    %210 = vrot.lane.b32.xlu0 %v208, 32
    %v211 = vpop.permute.xlu0 %210
    %v213 = vadd.f32 %v203, %v211
    %v214 = vtanh.pop %v213
    %216 = vrot.lane.b32.xlu0 %v214, 64
    %v217 = vpop.permute.xlu0 %216
    %v219 = vmul.f32 %v201, %v217
    %221 = vrot.lane.b32.xlu0 %v219, 32
    %v222 = vpop.permute.xlu0 %221
    %vm224 = vcmask 254976
    %225 = vst.msk [vmem:[#allocation2] sm:$0x3] %vm224, %v222
    %v226 = vsel %vm48, %v222, 0
    %228 = vmatprep.subr.mxu0 0.0
    %229 = vmatpush1.msra.mxu0 %v33
    %230 = vmatprep.subr.mxu0 0.0
    %231 = vmatpush1.msra.mxu0 %v34
    %232 = vmatprep.subr.mxu0 0.0
    %233 = vmatpush1.msra.mxu0 %v35
    %234 = vmatprep.subr.mxu0 0.0
    %235 = vmatpush1.msra.mxu0 %v36
    %236 = vmatprep.subr.mxu0 0.0
    %237 = vmatpush1.msra.mxu0 0.0
    %238 = vmatprep.subr.mxu0 0.0
    %239 = vmatpush1.msra.mxu0 0.0
    %240 = vmatprep.subr.mxu0 0.0
    %241 = vmatpush1.msra.mxu0 0.0
    %242 = vmatprep.subr.mxu0 0.0
    %243 = vmatpush1.msra.mxu0 0.0
    %244 = vmatprep.subr.mxu0 0.0
    %245 = vmatpush1.msra.mxu0 0.0
    %246 = vmatprep.subr.mxu0 0.0
    %247 = vmatpush1.msra.mxu0 0.0
    %248 = vmatprep.subr.mxu0 0.0
    %249 = vmatpush1.msra.mxu0 0.0
    %250 = vmatprep.subr.mxu0 0.0
    %251 = vmatpush1.msra.mxu0 0.0
    %252 = vmatprep.subr.mxu0 0.0
    %253 = vmatpush1.msra.mxu0 0.0
    %254 = vmatprep.subr.mxu0 0.0
    %255 = vmatpush1.msra.mxu0 0.0
    %256 = vmatprep.subr.mxu0 0.0
    %257 = vmatpush1.msra.mxu0 0.0
    %258 = vmatprep.subr.mxu0 0.0
    %259 = vmatpush1.msra.mxu0 0.0
    %260 = vmatprep.subr.mxu0 0.0
    %261 = vmatpush1.msra.mxu0 0.0
    %262 = vmatprep.subr.mxu0 0.0
    %263 = vmatpush1.msra.mxu0 0.0
    %264 = vmatprep.subr.mxu0 0.0
    %265 = vmatpush1.msra.mxu0 0.0
    %266 = vmatprep.subr.mxu0 0.0
    %267 = vmatpush1.msra.mxu0 0.0
    %268 = vmatprep.subr.mxu0 0.0
    %269 = vmatpush1.msra.mxu0 0.0
    %270 = vmatprep.subr.mxu0 0.0
    %271 = vmatpush1.msra.mxu0 0.0
    %272 = vmatprep.subr.mxu0 0.0
    %273 = vmatpush1.msra.mxu0 0.0
    %274 = vmatprep.subr.mxu0 0.0
    %275 = vmatpush1.msra.mxu0 0.0
    %276 = vmatprep.subr.mxu0 0.0
    %277 = vmatpush1.msra.mxu0 0.0
    %278 = vmatprep.subr.mxu0 0.0
    %279 = vmatpush1.msra.mxu0 0.0
    %280 = vmatprep.subr.mxu0 0.0
    %281 = vmatpush1.msra.mxu0 0.0
    %282 = vmatprep.subr.mxu0 0.0
    %283 = vmatpush1.msra.mxu0 0.0
    %284 = vmatprep.subr.mxu0 0.0
    %285 = vmatpush1.msra.mxu0 0.0
    %286 = vmatprep.subr.mxu0 0.0
    %287 = vmatpush1.msra.mxu0 0.0
    %288 = vmatprep.subr.mxu0 0.0
    %289 = vmatpush1.msra.mxu0 0.0
    %290 = vmatprep.subr.mxu0 0.0
    %291 = vmatpush1.msra.mxu0 0.0
    %292 = vmatprep.mubr.f32.mxu0 0.0
    %293 = vmatmul.mubr.f32.gmra.mrb[0].mxu0 %v226
    %v294 = vpop.f32.mrb[0].mxu0
    %v295 = vadd.f32 0.0, %v294
    %v296 = vpop.f32.mrb[0].mxu0
    %297 = vdwg.mxu0
    %v298 = vadd.f32 %v119, %v295
    %v299 = vxor.u32 %v298, 2147483648
    %v300 = vmul.f32 %v299, 1.442695
    %v301 = vpow.pop %v300
    %v302 = vadd.f32 %v301, 1.0
    %v303 = vrcp.pop %v302
    %v304 = vmul.f32 1.0, %v303
    %v305 = vtanh.pop %v298
    %v306 = vmul.f32 %v304, %v213
    %308 = vrot.lane.b32.xlu0 %v305, 64
    %v309 = vpop.permute.xlu0 %308
    %v311 = vmul.f32 %v304, %v309
    %313 = vrot.lane.b32.xlu0 %v311, 32
    %v314 = vpop.permute.xlu0 %313
    %v316 = vadd.f32 %v306, %v314
    %v317 = vtanh.pop %v316
    %319 = vrot.lane.b32.xlu0 %v317, 64
    %v320 = vpop.permute.xlu0 %319
    %v322 = vmul.f32 %v304, %v320
    %324 = vrot.lane.b32.xlu0 %v322, 32
    %v325 = vpop.permute.xlu0 %324
    %s327 = scalar_lea.vmem [#allocation2], 2
    %328 = vst.msk [vmem:[%s327] sm:$0x3] %vm224, %v325
    %v329 = vsel %vm48, %v325, 0
    %331 = vmatprep.subr.mxu0 0.0
    %332 = vmatpush1.msra.mxu0 %v33
    %333 = vmatprep.subr.mxu0 0.0
    %334 = vmatpush1.msra.mxu0 %v34
    %335 = vmatprep.subr.mxu0 0.0
    %336 = vmatpush1.msra.mxu0 %v35
    %337 = vmatprep.subr.mxu0 0.0
    %338 = vmatpush1.msra.mxu0 %v36
    %339 = vmatprep.subr.mxu0 0.0
    %340 = vmatpush1.msra.mxu0 0.0
    %341 = vmatprep.subr.mxu0 0.0
    %342 = vmatpush1.msra.mxu0 0.0
    %343 = vmatprep.subr.mxu0 0.0
    %344 = vmatpush1.msra.mxu0 0.0
    %345 = vmatprep.subr.mxu0 0.0
    %346 = vmatpush1.msra.mxu0 0.0
    %347 = vmatprep.subr.mxu0 0.0
    %348 = vmatpush1.msra.mxu0 0.0
    %349 = vmatprep.subr.mxu0 0.0
    %350 = vmatpush1.msra.mxu0 0.0
    %351 = vmatprep.subr.mxu0 0.0
    %352 = vmatpush1.msra.mxu0 0.0
    %353 = vmatprep.subr.mxu0 0.0
    %354 = vmatpush1.msra.mxu0 0.0
    %355 = vmatprep.subr.mxu0 0.0
    %356 = vmatpush1.msra.mxu0 0.0
    %357 = vmatprep.subr.mxu0 0.0
    %358 = vmatpush1.msra.mxu0 0.0
    %359 = vmatprep.subr.mxu0 0.0
    %360 = vmatpush1.msra.mxu0 0.0
    %361 = vmatprep.subr.mxu0 0.0
    %362 = vmatpush1.msra.mxu0 0.0
    %363 = vmatprep.subr.mxu0 0.0
    %364 = vmatpush1.msra.mxu0 0.0
    %365 = vmatprep.subr.mxu0 0.0
    %366 = vmatpush1.msra.mxu0 0.0
    %367 = vmatprep.subr.mxu0 0.0
    %368 = vmatpush1.msra.mxu0 0.0
    %369 = vmatprep.subr.mxu0 0.0
    %370 = vmatpush1.msra.mxu0 0.0
    %371 = vmatprep.subr.mxu0 0.0
    %372 = vmatpush1.msra.mxu0 0.0
    %373 = vmatprep.subr.mxu0 0.0
    %374 = vmatpush1.msra.mxu0 0.0
    %375 = vmatprep.subr.mxu0 0.0
    %376 = vmatpush1.msra.mxu0 0.0
    %377 = vmatprep.subr.mxu0 0.0
    %378 = vmatpush1.msra.mxu0 0.0
    %379 = vmatprep.subr.mxu0 0.0
    %380 = vmatpush1.msra.mxu0 0.0
    %381 = vmatprep.subr.mxu0 0.0
    %382 = vmatpush1.msra.mxu0 0.0
    %383 = vmatprep.subr.mxu0 0.0
    %384 = vmatpush1.msra.mxu0 0.0
    %385 = vmatprep.subr.mxu0 0.0
    %386 = vmatpush1.msra.mxu0 0.0
    %387 = vmatprep.subr.mxu0 0.0
    %388 = vmatpush1.msra.mxu0 0.0
    %389 = vmatprep.subr.mxu0 0.0
    %390 = vmatpush1.msra.mxu0 0.0
    %391 = vmatprep.subr.mxu0 0.0
    %392 = vmatpush1.msra.mxu0 0.0
    %393 = vmatprep.subr.mxu0 0.0
    %394 = vmatpush1.msra.mxu0 0.0
    %395 = vmatprep.mubr.f32.mxu0 0.0
    %396 = vmatmul.mubr.f32.gmra.mrb[0].mxu0 %v329
    %v397 = vpop.f32.mrb[0].mxu0
    %v398 = vadd.f32 0.0, %v397
    %v399 = vpop.f32.mrb[0].mxu0
    %400 = vdwg.mxu0
    %v401 = vadd.f32 %v119, %v398
    %v402 = vxor.u32 %v401, 2147483648
    %v403 = vmul.f32 %v402, 1.442695
    %v404 = vpow.pop %v403
    %v405 = vadd.f32 %v404, 1.0
    %v406 = vrcp.pop %v405
    %v407 = vmul.f32 1.0, %v406
    %v408 = vtanh.pop %v401
    %v409 = vmul.f32 %v407, %v316
    %411 = vrot.lane.b32.xlu0 %v408, 64
    %v412 = vpop.permute.xlu0 %411
    %v414 = vmul.f32 %v407, %v412
    %416 = vrot.lane.b32.xlu0 %v414, 32
    %v417 = vpop.permute.xlu0 %416
    %v419 = vadd.f32 %v409, %v417
    %v420 = vtanh.pop %v419
    %422 = vrot.lane.b32.xlu0 %v420, 64
    %v423 = vpop.permute.xlu0 %422
    %v425 = vmul.f32 %v407, %v423
    %427 = vrot.lane.b32.xlu0 %v425, 32
    %v428 = vpop.permute.xlu0 %427
    %s430 = scalar_lea.vmem [#allocation2], 4
    %431 = vst.msk [vmem:[%s430] sm:$0x3] %vm224, %v428
    %v432 = vsel %vm48, %v428, 0
    %434 = vmatprep.subr.mxu0 0.0
    %435 = vmatpush1.msra.mxu0 %v33
    %436 = vmatprep.subr.mxu0 0.0
    %437 = vmatpush1.msra.mxu0 %v34
    %438 = vmatprep.subr.mxu0 0.0
    %439 = vmatpush1.msra.mxu0 %v35
    %440 = vmatprep.subr.mxu0 0.0
    %441 = vmatpush1.msra.mxu0 %v36
    %442 = vmatprep.subr.mxu0 0.0
    %443 = vmatpush1.msra.mxu0 0.0
    %444 = vmatprep.subr.mxu0 0.0
    %445 = vmatpush1.msra.mxu0 0.0
    %446 = vmatprep.subr.mxu0 0.0
    %447 = vmatpush1.msra.mxu0 0.0
    %448 = vmatprep.subr.mxu0 0.0
    %449 = vmatpush1.msra.mxu0 0.0
    %450 = vmatprep.subr.mxu0 0.0
    %451 = vmatpush1.msra.mxu0 0.0
    %452 = vmatprep.subr.mxu0 0.0
    %453 = vmatpush1.msra.mxu0 0.0
    %454 = vmatprep.subr.mxu0 0.0
    %455 = vmatpush1.msra.mxu0 0.0
    %456 = vmatprep.subr.mxu0 0.0
    %457 = vmatpush1.msra.mxu0 0.0
    %458 = vmatprep.subr.mxu0 0.0
    %459 = vmatpush1.msra.mxu0 0.0
    %460 = vmatprep.subr.mxu0 0.0
    %461 = vmatpush1.msra.mxu0 0.0
    %462 = vmatprep.subr.mxu0 0.0
    %463 = vmatpush1.msra.mxu0 0.0
    %464 = vmatprep.subr.mxu0 0.0
    %465 = vmatpush1.msra.mxu0 0.0
    %466 = vmatprep.subr.mxu0 0.0
    %467 = vmatpush1.msra.mxu0 0.0
    %468 = vmatprep.subr.mxu0 0.0
    %469 = vmatpush1.msra.mxu0 0.0
    %470 = vmatprep.subr.mxu0 0.0
    %471 = vmatpush1.msra.mxu0 0.0
    %472 = vmatprep.subr.mxu0 0.0
    %473 = vmatpush1.msra.mxu0 0.0
    %474 = vmatprep.subr.mxu0 0.0
    %475 = vmatpush1.msra.mxu0 0.0
    %476 = vmatprep.subr.mxu0 0.0
    %477 = vmatpush1.msra.mxu0 0.0
    %478 = vmatprep.subr.mxu0 0.0
    %479 = vmatpush1.msra.mxu0 0.0
    %480 = vmatprep.subr.mxu0 0.0
    %481 = vmatpush1.msra.mxu0 0.0
    %482 = vmatprep.subr.mxu0 0.0
    %483 = vmatpush1.msra.mxu0 0.0
    %484 = vmatprep.subr.mxu0 0.0
    %485 = vmatpush1.msra.mxu0 0.0
    %486 = vmatprep.subr.mxu0 0.0
    %487 = vmatpush1.msra.mxu0 0.0
    %488 = vmatprep.subr.mxu0 0.0
    %489 = vmatpush1.msra.mxu0 0.0
    %490 = vmatprep.subr.mxu0 0.0
    %491 = vmatpush1.msra.mxu0 0.0
    %492 = vmatprep.subr.mxu0 0.0
    %493 = vmatpush1.msra.mxu0 0.0
    %494 = vmatprep.subr.mxu0 0.0
    %495 = vmatpush1.msra.mxu0 0.0
    %496 = vmatprep.subr.mxu0 0.0
    %497 = vmatpush1.msra.mxu0 0.0
    %498 = vmatprep.mubr.f32.mxu0 0.0
    %499 = vmatmul.mubr.f32.gmra.mrb[0].mxu0 %v432
    %v500 = vpop.f32.mrb[0].mxu0
    %v501 = vadd.f32 0.0, %v500
    %v502 = vpop.f32.mrb[0].mxu0
    %503 = vdwg.mxu0
    %v504 = vadd.f32 %v119, %v501
    %v505 = vxor.u32 %v504, 2147483648
    %v506 = vmul.f32 %v505, 1.442695
    %v507 = vpow.pop %v506
    %v508 = vadd.f32 %v507, 1.0
    %v509 = vrcp.pop %v508
    %v510 = vmul.f32 1.0, %v509
    %v511 = vtanh.pop %v504
    %v512 = vmul.f32 %v510, %v419
    %514 = vrot.lane.b32.xlu0 %v511, 64
    %v515 = vpop.permute.xlu0 %514
    %v517 = vmul.f32 %v510, %v515
    %519 = vrot.lane.b32.xlu0 %v517, 32
    %v520 = vpop.permute.xlu0 %519
    %v522 = vadd.f32 %v512, %v520
    %v523 = vtanh.pop %v522
    %525 = vrot.lane.b32.xlu0 %v523, 64
    %v526 = vpop.permute.xlu0 %525
    %v528 = vmul.f32 %v510, %v526
    %530 = vrot.lane.b32.xlu0 %v528, 32
    %v531 = vpop.permute.xlu0 %530
    %s533 = scalar_lea.vmem [#allocation2], 6
    %534 = vst.msk [vmem:[%s533] sm:$0x3] %vm224, %v531
    %v535 = vsel %vm48, %v531, 0
    %537 = vmatprep.subr.mxu0 0.0
    %538 = vmatpush1.msra.mxu0 %v33
    %539 = vmatprep.subr.mxu0 0.0
    %540 = vmatpush1.msra.mxu0 %v34
    %541 = vmatprep.subr.mxu0 0.0
    %542 = vmatpush1.msra.mxu0 %v35
    %543 = vmatprep.subr.mxu0 0.0
    %544 = vmatpush1.msra.mxu0 %v36
    %545 = vmatprep.subr.mxu0 0.0
    %546 = vmatpush1.msra.mxu0 0.0
    %547 = vmatprep.subr.mxu0 0.0
    %548 = vmatpush1.msra.mxu0 0.0
    %549 = vmatprep.subr.mxu0 0.0
    %550 = vmatpush1.msra.mxu0 0.0
    %551 = vmatprep.subr.mxu0 0.0
    %552 = vmatpush1.msra.mxu0 0.0
    %553 = vmatprep.subr.mxu0 0.0
    %554 = vmatpush1.msra.mxu0 0.0
    %555 = vmatprep.subr.mxu0 0.0
    %556 = vmatpush1.msra.mxu0 0.0
    %557 = vmatprep.subr.mxu0 0.0
    %558 = vmatpush1.msra.mxu0 0.0
    %559 = vmatprep.subr.mxu0 0.0
    %560 = vmatpush1.msra.mxu0 0.0
    %561 = vmatprep.subr.mxu0 0.0
    %562 = vmatpush1.msra.mxu0 0.0
    %563 = vmatprep.subr.mxu0 0.0
    %564 = vmatpush1.msra.mxu0 0.0
    %565 = vmatprep.subr.mxu0 0.0
    %566 = vmatpush1.msra.mxu0 0.0
    %567 = vmatprep.subr.mxu0 0.0
    %568 = vmatpush1.msra.mxu0 0.0
    %569 = vmatprep.subr.mxu0 0.0
    %570 = vmatpush1.msra.mxu0 0.0
    %571 = vmatprep.subr.mxu0 0.0
    %572 = vmatpush1.msra.mxu0 0.0
    %573 = vmatprep.subr.mxu0 0.0
    %574 = vmatpush1.msra.mxu0 0.0
    %575 = vmatprep.subr.mxu0 0.0
    %576 = vmatpush1.msra.mxu0 0.0
    %577 = vmatprep.subr.mxu0 0.0
    %578 = vmatpush1.msra.mxu0 0.0
    %579 = vmatprep.subr.mxu0 0.0
    %580 = vmatpush1.msra.mxu0 0.0
    %581 = vmatprep.subr.mxu0 0.0
    %582 = vmatpush1.msra.mxu0 0.0
    %583 = vmatprep.subr.mxu0 0.0
    %584 = vmatpush1.msra.mxu0 0.0
    %585 = vmatprep.subr.mxu0 0.0
    %586 = vmatpush1.msra.mxu0 0.0
    %587 = vmatprep.subr.mxu0 0.0
    %588 = vmatpush1.msra.mxu0 0.0
    %589 = vmatprep.subr.mxu0 0.0
    %590 = vmatpush1.msra.mxu0 0.0
    %591 = vmatprep.subr.mxu0 0.0
    %592 = vmatpush1.msra.mxu0 0.0
    %593 = vmatprep.subr.mxu0 0.0
    %594 = vmatpush1.msra.mxu0 0.0
    %595 = vmatprep.subr.mxu0 0.0
    %596 = vmatpush1.msra.mxu0 0.0
    %597 = vmatprep.subr.mxu0 0.0
    %598 = vmatpush1.msra.mxu0 0.0
    %599 = vmatprep.subr.mxu0 0.0
    %600 = vmatpush1.msra.mxu0 0.0
    %601 = vmatprep.mubr.f32.mxu0 0.0
    %602 = vmatmul.mubr.f32.gmra.mrb[0].mxu0 %v535
    %v603 = vpop.f32.mrb[0].mxu0
    %v604 = vadd.f32 0.0, %v603
    %v605 = vpop.f32.mrb[0].mxu0
    %606 = vdwg.mxu0
    %v607 = vadd.f32 %v119, %v604
    %v608 = vxor.u32 %v607, 2147483648
    %v609 = vmul.f32 %v608, 1.442695
    %v610 = vpow.pop %v609
    %v611 = vadd.f32 %v610, 1.0
    %v612 = vrcp.pop %v611
    %v613 = vmul.f32 1.0, %v612
    %v614 = vtanh.pop %v607
    %v615 = vmul.f32 %v613, %v522
    %617 = vrot.lane.b32.xlu0 %v614, 64
    %v618 = vpop.permute.xlu0 %617
    %v620 = vmul.f32 %v613, %v618
    %622 = vrot.lane.b32.xlu0 %v620, 32
    %v623 = vpop.permute.xlu0 %622
    %v625 = vadd.f32 %v615, %v623
    %v626 = vtanh.pop %v625
    %628 = vrot.lane.b32.xlu0 %v626, 64
    %v629 = vpop.permute.xlu0 %628
    %v631 = vmul.f32 %v613, %v629
    %633 = vrot.lane.b32.xlu0 %v631, 32
    %v634 = vpop.permute.xlu0 %633
    %s636 = scalar_lea.vmem [#allocation2], 8
    %637 = vst.msk [vmem:[%s636] sm:$0x3] %vm224, %v634
    %v638 = vsel %vm48, %v634, 0
    %640 = vmatprep.subr.mxu0 0.0
    %641 = vmatpush1.msra.mxu0 %v33
    %642 = vmatprep.subr.mxu0 0.0
    %643 = vmatpush1.msra.mxu0 %v34
    %644 = vmatprep.subr.mxu0 0.0
    %645 = vmatpush1.msra.mxu0 %v35
    %646 = vmatprep.subr.mxu0 0.0
    %647 = vmatpush1.msra.mxu0 %v36
    %648 = vmatprep.subr.mxu0 0.0
    %649 = vmatpush1.msra.mxu0 0.0
    %650 = vmatprep.subr.mxu0 0.0
    %651 = vmatpush1.msra.mxu0 0.0
    %652 = vmatprep.subr.mxu0 0.0
    %653 = vmatpush1.msra.mxu0 0.0
    %654 = vmatprep.subr.mxu0 0.0
    %655 = vmatpush1.msra.mxu0 0.0
    %656 = vmatprep.subr.mxu0 0.0
    %657 = vmatpush1.msra.mxu0 0.0
    %658 = vmatprep.subr.mxu0 0.0
    %659 = vmatpush1.msra.mxu0 0.0
    %660 = vmatprep.subr.mxu0 0.0
    %661 = vmatpush1.msra.mxu0 0.0
    %662 = vmatprep.subr.mxu0 0.0
    %663 = vmatpush1.msra.mxu0 0.0
    %664 = vmatprep.subr.mxu0 0.0
    %665 = vmatpush1.msra.mxu0 0.0
    %666 = vmatprep.subr.mxu0 0.0
    %667 = vmatpush1.msra.mxu0 0.0
    %668 = vmatprep.subr.mxu0 0.0
    %669 = vmatpush1.msra.mxu0 0.0
    %670 = vmatprep.subr.mxu0 0.0
    %671 = vmatpush1.msra.mxu0 0.0
    %672 = vmatprep.subr.mxu0 0.0
    %673 = vmatpush1.msra.mxu0 0.0
    %674 = vmatprep.subr.mxu0 0.0
    %675 = vmatpush1.msra.mxu0 0.0
    %676 = vmatprep.subr.mxu0 0.0
    %677 = vmatpush1.msra.mxu0 0.0
    %678 = vmatprep.subr.mxu0 0.0
    %679 = vmatpush1.msra.mxu0 0.0
    %680 = vmatprep.subr.mxu0 0.0
    %681 = vmatpush1.msra.mxu0 0.0
    %682 = vmatprep.subr.mxu0 0.0
    %683 = vmatpush1.msra.mxu0 0.0
    %684 = vmatprep.subr.mxu0 0.0
    %685 = vmatpush1.msra.mxu0 0.0
    %686 = vmatprep.subr.mxu0 0.0
    %687 = vmatpush1.msra.mxu0 0.0
    %688 = vmatprep.subr.mxu0 0.0
    %689 = vmatpush1.msra.mxu0 0.0
    %690 = vmatprep.subr.mxu0 0.0
    %691 = vmatpush1.msra.mxu0 0.0
    %692 = vmatprep.subr.mxu0 0.0
    %693 = vmatpush1.msra.mxu0 0.0
    %694 = vmatprep.subr.mxu0 0.0
    %695 = vmatpush1.msra.mxu0 0.0
    %696 = vmatprep.subr.mxu0 0.0
    %697 = vmatpush1.msra.mxu0 0.0
    %698 = vmatprep.subr.mxu0 0.0
    %699 = vmatpush1.msra.mxu0 0.0
    %700 = vmatprep.subr.mxu0 0.0
    %701 = vmatpush1.msra.mxu0 0.0
    %702 = vmatprep.subr.mxu0 0.0
    %703 = vmatpush1.msra.mxu0 0.0
    %704 = vmatprep.mubr.f32.mxu0 0.0
    %705 = vmatmul.mubr.f32.gmra.mrb[0].mxu0 %v638
    %v706 = vpop.f32.mrb[0].mxu0
    %v707 = vadd.f32 0.0, %v706
    %v708 = vpop.f32.mrb[0].mxu0
    %709 = vdwg.mxu0
    %v710 = vadd.f32 %v119, %v707
    %v711 = vxor.u32 %v710, 2147483648
    %v712 = vmul.f32 %v711, 1.442695
    %v713 = vpow.pop %v712
    %v714 = vadd.f32 %v713, 1.0
    %v715 = vrcp.pop %v714
    %v716 = vmul.f32 1.0, %v715
    %v717 = vtanh.pop %v710
    %v718 = vmul.f32 %v716, %v625
    %720 = vrot.lane.b32.xlu0 %v717, 64
    %v721 = vpop.permute.xlu0 %720
    %v723 = vmul.f32 %v716, %v721
    %725 = vrot.lane.b32.xlu0 %v723, 32
    %v726 = vpop.permute.xlu0 %725
    %v728 = vadd.f32 %v718, %v726
    %v729 = vtanh.pop %v728
    %731 = vrot.lane.b32.xlu0 %v729, 64
    %v732 = vpop.permute.xlu0 %731
    %v734 = vmul.f32 %v716, %v732
    %736 = vrot.lane.b32.xlu0 %v734, 32
    %v737 = vpop.permute.xlu0 %736
    %s739 = scalar_lea.vmem [#allocation2], 10
    %740 = vst.msk [vmem:[%s739] sm:$0x3] %vm224, %v737
    %v741 = vsel %vm48, %v737, 0
    %743 = vmatprep.subr.mxu0 0.0
    %744 = vmatpush1.msra.mxu0 %v33
    %745 = vmatprep.subr.mxu0 0.0
    %746 = vmatpush1.msra.mxu0 %v34
    %747 = vmatprep.subr.mxu0 0.0
    %748 = vmatpush1.msra.mxu0 %v35
    %749 = vmatprep.subr.mxu0 0.0
    %750 = vmatpush1.msra.mxu0 %v36
    %751 = vmatprep.subr.mxu0 0.0
    %752 = vmatpush1.msra.mxu0 0.0
    %753 = vmatprep.subr.mxu0 0.0
    %754 = vmatpush1.msra.mxu0 0.0
    %755 = vmatprep.subr.mxu0 0.0
    %756 = vmatpush1.msra.mxu0 0.0
    %757 = vmatprep.subr.mxu0 0.0
    %758 = vmatpush1.msra.mxu0 0.0
    %759 = vmatprep.subr.mxu0 0.0
    %760 = vmatpush1.msra.mxu0 0.0
    %761 = vmatprep.subr.mxu0 0.0
    %762 = vmatpush1.msra.mxu0 0.0
    %763 = vmatprep.subr.mxu0 0.0
    %764 = vmatpush1.msra.mxu0 0.0
    %765 = vmatprep.subr.mxu0 0.0
    %766 = vmatpush1.msra.mxu0 0.0
    %767 = vmatprep.subr.mxu0 0.0
    %768 = vmatpush1.msra.mxu0 0.0
    %769 = vmatprep.subr.mxu0 0.0
    %770 = vmatpush1.msra.mxu0 0.0
    %771 = vmatprep.subr.mxu0 0.0
    %772 = vmatpush1.msra.mxu0 0.0
    %773 = vmatprep.subr.mxu0 0.0
    %774 = vmatpush1.msra.mxu0 0.0
    %775 = vmatprep.subr.mxu0 0.0
    %776 = vmatpush1.msra.mxu0 0.0
    %777 = vmatprep.subr.mxu0 0.0
    %778 = vmatpush1.msra.mxu0 0.0
    %779 = vmatprep.subr.mxu0 0.0
    %780 = vmatpush1.msra.mxu0 0.0
    %781 = vmatprep.subr.mxu0 0.0
    %782 = vmatpush1.msra.mxu0 0.0
    %783 = vmatprep.subr.mxu0 0.0
    %784 = vmatpush1.msra.mxu0 0.0
    %785 = vmatprep.subr.mxu0 0.0
    %786 = vmatpush1.msra.mxu0 0.0
    %787 = vmatprep.subr.mxu0 0.0
    %788 = vmatpush1.msra.mxu0 0.0
    %789 = vmatprep.subr.mxu0 0.0
    %790 = vmatpush1.msra.mxu0 0.0
    %791 = vmatprep.subr.mxu0 0.0
    %792 = vmatpush1.msra.mxu0 0.0
    %793 = vmatprep.subr.mxu0 0.0
    %794 = vmatpush1.msra.mxu0 0.0
    %795 = vmatprep.subr.mxu0 0.0
    %796 = vmatpush1.msra.mxu0 0.0
    %797 = vmatprep.subr.mxu0 0.0
    %798 = vmatpush1.msra.mxu0 0.0
    %799 = vmatprep.subr.mxu0 0.0
    %800 = vmatpush1.msra.mxu0 0.0
    %801 = vmatprep.subr.mxu0 0.0
    %802 = vmatpush1.msra.mxu0 0.0
    %803 = vmatprep.subr.mxu0 0.0
    %804 = vmatpush1.msra.mxu0 0.0
    %805 = vmatprep.subr.mxu0 0.0
    %806 = vmatpush1.msra.mxu0 0.0
    %807 = vmatprep.mubr.f32.mxu0 0.0
    %808 = vmatmul.mubr.f32.gmra.mrb[0].mxu0 %v741
    %v809 = vpop.f32.mrb[0].mxu0
    %v810 = vadd.f32 0.0, %v809
    %v811 = vpop.f32.mrb[0].mxu0
    %812 = vdwg.mxu0
    %v813 = vadd.f32 %v119, %v810
    %v814 = vxor.u32 %v813, 2147483648
    %v815 = vmul.f32 %v814, 1.442695
    %v816 = vpow.pop %v815
    %v817 = vadd.f32 %v816, 1.0
    %v818 = vrcp.pop %v817
    %v819 = vmul.f32 1.0, %v818
    %v820 = vtanh.pop %v813
    %v821 = vmul.f32 %v819, %v728
    %823 = vrot.lane.b32.xlu0 %v820, 64
    %v824 = vpop.permute.xlu0 %823
    %v826 = vmul.f32 %v819, %v824
    %828 = vrot.lane.b32.xlu0 %v826, 32
    %v829 = vpop.permute.xlu0 %828
    %v831 = vadd.f32 %v821, %v829
    %v832 = vtanh.pop %v831
    %834 = vrot.lane.b32.xlu0 %v832, 64
    %v835 = vpop.permute.xlu0 %834
    %v837 = vmul.f32 %v819, %v835
    %839 = vrot.lane.b32.xlu0 %v837, 32
    %v840 = vpop.permute.xlu0 %839
    %s842 = scalar_lea.vmem [#allocation2], 12
    %843 = vst.msk [vmem:[%s842] sm:$0x3] %vm224, %v840
    %v844 = vsel %vm48, %v840, 0
    %846 = vmatprep.subr.mxu0 0.0
    %847 = vmatpush1.msra.mxu0 %v33
    %848 = vmatprep.subr.mxu0 0.0
    %849 = vmatpush1.msra.mxu0 %v34
    %850 = vmatprep.subr.mxu0 0.0
    %851 = vmatpush1.msra.mxu0 %v35
    %852 = vmatprep.subr.mxu0 0.0
    %853 = vmatpush1.msra.mxu0 %v36
    %854 = vmatprep.subr.mxu0 0.0
    %855 = vmatpush1.msra.mxu0 0.0
    %856 = vmatprep.subr.mxu0 0.0
    %857 = vmatpush1.msra.mxu0 0.0
    %858 = vmatprep.subr.mxu0 0.0
    %859 = vmatpush1.msra.mxu0 0.0
    %860 = vmatprep.subr.mxu0 0.0
    %861 = vmatpush1.msra.mxu0 0.0
    %862 = vmatprep.subr.mxu0 0.0
    %863 = vmatpush1.msra.mxu0 0.0
    %864 = vmatprep.subr.mxu0 0.0
    %865 = vmatpush1.msra.mxu0 0.0
    %866 = vmatprep.subr.mxu0 0.0
    %867 = vmatpush1.msra.mxu0 0.0
    %868 = vmatprep.subr.mxu0 0.0
    %869 = vmatpush1.msra.mxu0 0.0
    %870 = vmatprep.subr.mxu0 0.0
    %871 = vmatpush1.msra.mxu0 0.0
    %872 = vmatprep.subr.mxu0 0.0
    %873 = vmatpush1.msra.mxu0 0.0
    %874 = vmatprep.subr.mxu0 0.0
    %875 = vmatpush1.msra.mxu0 0.0
    %876 = vmatprep.subr.mxu0 0.0
    %877 = vmatpush1.msra.mxu0 0.0
    %878 = vmatprep.subr.mxu0 0.0
    %879 = vmatpush1.msra.mxu0 0.0
    %880 = vmatprep.subr.mxu0 0.0
    %881 = vmatpush1.msra.mxu0 0.0
    %882 = vmatprep.subr.mxu0 0.0
    %883 = vmatpush1.msra.mxu0 0.0
    %884 = vmatprep.subr.mxu0 0.0
    %885 = vmatpush1.msra.mxu0 0.0
    %886 = vmatprep.subr.mxu0 0.0
    %887 = vmatpush1.msra.mxu0 0.0
    %888 = vmatprep.subr.mxu0 0.0
    %889 = vmatpush1.msra.mxu0 0.0
    %890 = vmatprep.subr.mxu0 0.0
    %891 = vmatpush1.msra.mxu0 0.0
    %892 = vmatprep.subr.mxu0 0.0
    %893 = vmatpush1.msra.mxu0 0.0
    %894 = vmatprep.subr.mxu0 0.0
    %895 = vmatpush1.msra.mxu0 0.0
    %896 = vmatprep.subr.mxu0 0.0
    %897 = vmatpush1.msra.mxu0 0.0
    %898 = vmatprep.subr.mxu0 0.0
    %899 = vmatpush1.msra.mxu0 0.0
    %900 = vmatprep.subr.mxu0 0.0
    %901 = vmatpush1.msra.mxu0 0.0
    %902 = vmatprep.subr.mxu0 0.0
    %903 = vmatpush1.msra.mxu0 0.0
    %904 = vmatprep.subr.mxu0 0.0
    %905 = vmatpush1.msra.mxu0 0.0
    %906 = vmatprep.subr.mxu0 0.0
    %907 = vmatpush1.msra.mxu0 0.0
    %908 = vmatprep.subr.mxu0 0.0
    %909 = vmatpush1.msra.mxu0 0.0
    %910 = vmatprep.mubr.f32.mxu0 0.0
    %911 = vmatmul.mubr.f32.gmra.mrb[0].mxu0 %v844
    %v912 = vpop.f32.mrb[0].mxu0
    %v913 = vadd.f32 0.0, %v912
    %v914 = vpop.f32.mrb[0].mxu0
    %915 = vdwg.mxu0
    %v916 = vadd.f32 %v119, %v913
    %v917 = vxor.u32 %v916, 2147483648
    %v918 = vmul.f32 %v917, 1.442695
    %v919 = vpow.pop %v918
    %v920 = vadd.f32 %v919, 1.0
    %v921 = vrcp.pop %v920
    %v922 = vmul.f32 1.0, %v921
    %v923 = vtanh.pop %v916
    %v924 = vmul.f32 %v922, %v831
    %926 = vrot.lane.b32.xlu0 %v923, 64
    %v927 = vpop.permute.xlu0 %926
    %v929 = vmul.f32 %v922, %v927
    %931 = vrot.lane.b32.xlu0 %v929, 32
    %v932 = vpop.permute.xlu0 %931
    %v934 = vadd.f32 %v924, %v932
    %v935 = vtanh.pop %v934
    %937 = vrot.lane.b32.xlu0 %v935, 64
    %v938 = vpop.permute.xlu0 %937
    %v940 = vmul.f32 %v922, %v938
    %942 = vrot.lane.b32.xlu0 %v940, 32
    %v943 = vpop.permute.xlu0 %942
    %s945 = scalar_lea.vmem [#allocation2], 14
    %946 = vst.msk [vmem:[%s945] sm:$0x3] %vm224, %v943
    %v947 = vld [vmem:[#allocation2] sm:$0x3]
    %v948 = vld [vmem:[#allocation2 + $0x2] sm:$0x3]
    %v949 = vld [vmem:[#allocation2 + $0x4] sm:$0x3]
    %v950 = vld [vmem:[#allocation2 + $0x6] sm:$0x3]
    %v951 = vld [vmem:[#allocation2 + $0x8] sm:$0x3]
    %v952 = vld [vmem:[#allocation2 + $0xa] sm:$0x3]
    %v953 = vld [vmem:[#allocation2 + $0xc] sm:$0x3]
    %v954 = vld [vmem:[#allocation2 + $0xe] sm:$0x3]
    %v955 = vld [vmem:[%s4] sm:$0xff]
    %v956 = vld [vmem:[%s4 + $0x8] sm:$0xff]
    %v957 = vld [vmem:[%s4 + $0x10] sm:$0xff]
    %v958 = vld [vmem:[%s4 + $0x18] sm:$0xff]
    %v959 = vld [vmem:[%s5] sm:$0x1]
    %v961 = vlaneseq
    %v962 = vshrl.u32 %v961, 7
    %v963 = vsub.s32 0, %v962
    %v964 = vrot.slane %v959, %v963
    %v974 = vcombine.low %v947, %v948
    %v975 = vcombine.low %v949, %v950
    %v977 = vunpack.c.l.s4 1983009808
    %v978 = vunpack.c.0.s8 %v977
    %v979 = vlaneseq
    %v980 = vshrl.u32 %v979, 7
    %v981 = vsub.s32 %v978, %v980
    %v982 = vrot.slane %v974, %v981
    %v984 = vunpack.c.l.s4 1983009808
    %v985 = vunpack.c.0.s8 %v984
    %v986 = vlaneseq
    %v987 = vshrl.u32 %v986, 7
    %v988 = vsub.s32 %v985, %v987
    %v989 = vrot.slane %v975, %v988
    %v990 = vcombine.low %v982, %v989
    %v991 = vcombine.low %v951, %v952
    %v992 = vcombine.low %v953, %v954
    %v994 = vunpack.c.l.s4 1983009808
    %v995 = vunpack.c.0.s8 %v994
    %v996 = vlaneseq
    %v997 = vshrl.u32 %v996, 7
    %v998 = vsub.s32 %v995, %v997
    %v999 = vrot.slane %v991, %v998
    %v1001 = vunpack.c.l.s4 1983009808
    %v1002 = vunpack.c.0.s8 %v1001
    %v1003 = vlaneseq
    %v1004 = vshrl.u32 %v1003, 7
    %v1005 = vsub.s32 %v1002, %v1004
    %v1006 = vrot.slane %v992, %v1005
    %v1007 = vcombine.low %v999, %v1006
    %v1008 = vsel %vm48, %v990, 0
    %v1010 = vsel %vm48, %v1007, 0
    %1012 = vmatprep.subr.mxu0 0.0
    %1013 = vmatpush1.msra.mxu0 %v955
    %1014 = vmatprep.subr.mxu0 0.0
    %1015 = vmatpush1.msra.mxu0 %v956
    %1016 = vmatprep.subr.mxu0 0.0
    %1017 = vmatpush1.msra.mxu0 %v957
    %1018 = vmatprep.subr.mxu0 0.0
    %1019 = vmatpush1.msra.mxu0 %v958
    %1020 = vmatprep.subr.mxu0 0.0
    %1021 = vmatpush1.msra.mxu0 0.0
    %1022 = vmatprep.subr.mxu0 0.0
    %1023 = vmatpush1.msra.mxu0 0.0
    %1024 = vmatprep.subr.mxu0 0.0
    %1025 = vmatpush1.msra.mxu0 0.0
    %1026 = vmatprep.subr.mxu0 0.0
    %1027 = vmatpush1.msra.mxu0 0.0
    %1028 = vmatprep.subr.mxu0 0.0
    %1029 = vmatpush1.msra.mxu0 0.0
    %1030 = vmatprep.subr.mxu0 0.0
    %1031 = vmatpush1.msra.mxu0 0.0
    %1032 = vmatprep.subr.mxu0 0.0
    %1033 = vmatpush1.msra.mxu0 0.0
    %1034 = vmatprep.subr.mxu0 0.0
    %1035 = vmatpush1.msra.mxu0 0.0
    %1036 = vmatprep.subr.mxu0 0.0
    %1037 = vmatpush1.msra.mxu0 0.0
    %1038 = vmatprep.subr.mxu0 0.0
    %1039 = vmatpush1.msra.mxu0 0.0
    %1040 = vmatprep.subr.mxu0 0.0
    %1041 = vmatpush1.msra.mxu0 0.0
    %1042 = vmatprep.subr.mxu0 0.0
    %1043 = vmatpush1.msra.mxu0 0.0
    %1044 = vmatprep.subr.mxu0 0.0
    %1045 = vmatpush1.msra.mxu0 0.0
    %1046 = vmatprep.subr.mxu0 0.0
    %1047 = vmatpush1.msra.mxu0 0.0
    %1048 = vmatprep.subr.mxu0 0.0
    %1049 = vmatpush1.msra.mxu0 0.0
    %1050 = vmatprep.subr.mxu0 0.0
    %1051 = vmatpush1.msra.mxu0 0.0
    %1052 = vmatprep.subr.mxu0 0.0
    %1053 = vmatpush1.msra.mxu0 0.0
    %1054 = vmatprep.subr.mxu0 0.0
    %1055 = vmatpush1.msra.mxu0 0.0
    %1056 = vmatprep.subr.mxu0 0.0
    %1057 = vmatpush1.msra.mxu0 0.0
    %1058 = vmatprep.subr.mxu0 0.0
    %1059 = vmatpush1.msra.mxu0 0.0
    %1060 = vmatprep.subr.mxu0 0.0
    %1061 = vmatpush1.msra.mxu0 0.0
    %1062 = vmatprep.subr.mxu0 0.0
    %1063 = vmatpush1.msra.mxu0 0.0
    %1064 = vmatprep.subr.mxu0 0.0
    %1065 = vmatpush1.msra.mxu0 0.0
    %1066 = vmatprep.subr.mxu0 0.0
    %1067 = vmatpush1.msra.mxu0 0.0
    %1068 = vmatprep.subr.mxu0 0.0
    %1069 = vmatpush1.msra.mxu0 0.0
    %1070 = vmatprep.subr.mxu0 0.0
    %1071 = vmatpush1.msra.mxu0 0.0
    %1072 = vmatprep.subr.mxu0 0.0
    %1073 = vmatpush1.msra.mxu0 0.0
    %1074 = vmatprep.subr.mxu0 0.0
    %1075 = vmatpush1.msra.mxu0 0.0
    %1076 = vmatprep.mubr.f32.mxu0 0.0
    %1077 = vmatmul.mubr.f32.gmra.mrb[0].mxu0 %v1008
    %v1078 = vpop.f32.mrb[0].mxu0
    %v1079 = vadd.f32 %v964, %v1078
    %v1080 = vpop.f32.mrb[0].mxu0
    %1081 = vmatprep.mubr.f32.mxu0 0.0
    %1082 = vmatmul.mubr.f32.gmra.mrb[0].mxu0 %v1010
    %v1083 = vpop.f32.mrb[0].mxu0
    %v1084 = vadd.f32 %v964, %v1083
    %v1085 = vpop.f32.mrb[0].mxu0
    %1086 = vdwg.mxu0
    %v1087 = vtanh.pop %v1079
    %v1088 = vtanh.pop %v1084
    %v1091 = vcombine.high %v1087, %v1087
    %v1093 = vunpack.c.l.s4 1983009808
    %v1094 = vunpack.c.0.s8 %v1093
    %v1095 = vlaneseq
    %v1096 = vshrl.u32 %v1095, 7
    %v1097 = vsub.s32 %v1094, %v1096
    %v1098 = vrot.slane %v1087, %v1097
    %v1100 = vunpack.c.l.s4 1983009808
    %v1101 = vunpack.c.0.s8 %v1100
    %v1102 = vlaneseq
    %v1103 = vshrl.u32 %v1102, 7
    %v1104 = vsub.s32 %v1101, %v1103
    %v1105 = vrot.slane %v1091, %v1104
    %v1106 = vcombine.high %v1098, %v1098
    %v1107 = vcombine.high %v1105, %v1105
    %v1108 = vcombine.high %v1088, %v1088
    %v1110 = vunpack.c.l.s4 1983009808
    %v1111 = vunpack.c.0.s8 %v1110
    %v1112 = vlaneseq
    %v1113 = vshrl.u32 %v1112, 7
    %v1114 = vsub.s32 %v1111, %v1113
    %v1115 = vrot.slane %v1088, %v1114
    %v1117 = vunpack.c.l.s4 1983009808
    %v1118 = vunpack.c.0.s8 %v1117
    %v1119 = vlaneseq
    %v1120 = vshrl.u32 %v1119, 7
    %v1121 = vsub.s32 %v1118, %v1120
    %v1122 = vrot.slane %v1108, %v1121
    %v1123 = vcombine.high %v1115, %v1115
    %v1124 = vcombine.high %v1122, %v1122
    %v1125 = vlaneseq
    %v1126 = vshrl.u32 %v1125, 7
    %v1127 = vsub.s32 0, %v1126
    %v1128 = vrot.slane %v1098, %v1127
    %v1129 = vlaneseq
    %v1130 = vshrl.u32 %v1129, 7
    %v1131 = vsub.s32 0, %v1130
    %v1132 = vrot.slane %v1106, %v1131
    %v1133 = vlaneseq
    %v1134 = vshrl.u32 %v1133, 7
    %v1135 = vsub.s32 0, %v1134
    %v1136 = vrot.slane %v1105, %v1135
    %v1137 = vlaneseq
    %v1138 = vshrl.u32 %v1137, 7
    %v1139 = vsub.s32 0, %v1138
    %v1140 = vrot.slane %v1107, %v1139
    %v1141 = vlaneseq
    %v1142 = vshrl.u32 %v1141, 7
    %v1143 = vsub.s32 0, %v1142
    %v1144 = vrot.slane %v1115, %v1143
    %v1145 = vlaneseq
    %v1146 = vshrl.u32 %v1145, 7
    %v1147 = vsub.s32 0, %v1146
    %v1148 = vrot.slane %v1123, %v1147
    %v1149 = vlaneseq
    %v1150 = vshrl.u32 %v1149, 7
    %v1151 = vsub.s32 0, %v1150
    %v1152 = vrot.slane %v1122, %v1151
    %v1153 = vlaneseq
    %v1154 = vshrl.u32 %v1153, 7
    %v1155 = vsub.s32 0, %v1154
    %v1156 = vrot.slane %v1124, %v1155
    %vm1157 = vcmask 1041409
    %v1158 = vsel %vm1157, %v1132, %v1128
    %vm1159 = vcmask 1042434
    %v1160 = vsel %vm1159, %v1136, %v1158
    %vm1161 = vcmask 1043459
    %v1162 = vsel %vm1161, %v1140, %v1160
    %vm1163 = vcmask 1044484
    %v1164 = vsel %vm1163, %v1144, %v1162
    %vm1165 = vcmask 1045509
    %v1166 = vsel %vm1165, %v1148, %v1164
    %vm1167 = vcmask 1046534
    %v1168 = vsel %vm1167, %v1152, %v1166
    %vm1169 = vcmask 1047559
    %v1170 = vsel %vm1169, %v1156, %v1168
    %vm1172 = vcmask 31744
    %1173 = vst.msk [vmem:[%s8] sm:$0xff] %vm1172, %v1170
    %v1174 = vlaneseq
    %v1175 = vshrl.u32 %v1174, 7
    %v1176 = vsub.s32 1, %v1175
    %v1177 = vrot.slane %v1098, %v1176
    %v1178 = vlaneseq
    %v1179 = vshrl.u32 %v1178, 7
    %v1180 = vsub.s32 1, %v1179
    %v1181 = vrot.slane %v1106, %v1180
    %v1182 = vlaneseq
    %v1183 = vshrl.u32 %v1182, 7
    %v1184 = vsub.s32 1, %v1183
    %v1185 = vrot.slane %v1105, %v1184
    %v1186 = vlaneseq
    %v1187 = vshrl.u32 %v1186, 7
    %v1188 = vsub.s32 1, %v1187
    %v1189 = vrot.slane %v1107, %v1188
    %v1190 = vlaneseq
    %v1191 = vshrl.u32 %v1190, 7
    %v1192 = vsub.s32 1, %v1191
    %v1193 = vrot.slane %v1115, %v1192
    %v1194 = vlaneseq
    %v1195 = vshrl.u32 %v1194, 7
    %v1196 = vsub.s32 1, %v1195
    %v1197 = vrot.slane %v1123, %v1196
    %v1198 = vlaneseq
    %v1199 = vshrl.u32 %v1198, 7
    %v1200 = vsub.s32 1, %v1199
    %v1201 = vrot.slane %v1122, %v1200
    %v1202 = vlaneseq
    %v1203 = vshrl.u32 %v1202, 7
    %v1204 = vsub.s32 1, %v1203
    %v1205 = vrot.slane %v1124, %v1204
    %v1206 = vsel %vm1159, %v1181, %v1177
    %v1207 = vsel %vm1161, %v1185, %v1206
    %v1208 = vsel %vm1163, %v1189, %v1207
    %v1209 = vsel %vm1165, %v1193, %v1208
    %v1210 = vsel %vm1167, %v1197, %v1209
    %v1211 = vsel %vm1169, %v1201, %v1210
    %s1214 = scalar_lea.vmem %s8, 8
    %vm1215 = vcmask 31745
    %1216 = vst.msk [vmem:[%s1214 - $0x1] sm:$0xfe] %vm1215, %v1211
    %vm1217 = vcmask 24576
    %1218 = vst.msk [vmem:[%s1214 + $0x7] sm:$0x1] %vm1217, %v1205
    %v1219 = vld [vmem:[%s6] sm:$0xff]
    %v1220 = vld [vmem:[%s6 + $0x8] sm:$0xff]
    %v1221 = vld [vmem:[%s6 + $0x10] sm:$0xff]
    %v1222 = vld [vmem:[%s6 + $0x18] sm:$0xff]
    %v1223 = vld [vmem:[%s7] sm:$0x1]
    %v1225 = vlaneseq
    %v1226 = vshrl.u32 %v1225, 7
    %v1227 = vsub.s32 0, %v1226
    %v1228 = vrot.slane %v1223, %v1227
    %v1230 = vsel %vm48, %v943, 0
    %1232 = vmatprep.subr.mxu0 0.0
    %1233 = vmatpush1.msra.mxu0 %v1219
    %1234 = vmatprep.subr.mxu0 0.0
    %1235 = vmatpush1.msra.mxu0 %v1220
    %1236 = vmatprep.subr.mxu0 0.0
    %1237 = vmatpush1.msra.mxu0 %v1221
    %1238 = vmatprep.subr.mxu0 0.0
    %1239 = vmatpush1.msra.mxu0 %v1222
    %1240 = vmatprep.subr.mxu0 0.0
    %1241 = vmatpush1.msra.mxu0 0.0
    %1242 = vmatprep.subr.mxu0 0.0
    %1243 = vmatpush1.msra.mxu0 0.0
    %1244 = vmatprep.subr.mxu0 0.0
    %1245 = vmatpush1.msra.mxu0 0.0
    %1246 = vmatprep.subr.mxu0 0.0
    %1247 = vmatpush1.msra.mxu0 0.0
    %1248 = vmatprep.subr.mxu0 0.0
    %1249 = vmatpush1.msra.mxu0 0.0
    %1250 = vmatprep.subr.mxu0 0.0
    %1251 = vmatpush1.msra.mxu0 0.0
    %1252 = vmatprep.subr.mxu0 0.0
    %1253 = vmatpush1.msra.mxu0 0.0
    %1254 = vmatprep.subr.mxu0 0.0
    %1255 = vmatpush1.msra.mxu0 0.0
    %1256 = vmatprep.subr.mxu0 0.0
    %1257 = vmatpush1.msra.mxu0 0.0
    %1258 = vmatprep.subr.mxu0 0.0
    %1259 = vmatpush1.msra.mxu0 0.0
    %1260 = vmatprep.subr.mxu0 0.0
    %1261 = vmatpush1.msra.mxu0 0.0
    %1262 = vmatprep.subr.mxu0 0.0
    %1263 = vmatpush1.msra.mxu0 0.0
    %1264 = vmatprep.subr.mxu0 0.0
    %1265 = vmatpush1.msra.mxu0 0.0
    %1266 = vmatprep.subr.mxu0 0.0
    %1267 = vmatpush1.msra.mxu0 0.0
    %1268 = vmatprep.subr.mxu0 0.0
    %1269 = vmatpush1.msra.mxu0 0.0
    %1270 = vmatprep.subr.mxu0 0.0
    %1271 = vmatpush1.msra.mxu0 0.0
    %1272 = vmatprep.subr.mxu0 0.0
    %1273 = vmatpush1.msra.mxu0 0.0
    %1274 = vmatprep.subr.mxu0 0.0
    %1275 = vmatpush1.msra.mxu0 0.0
    %1276 = vmatprep.subr.mxu0 0.0
    %1277 = vmatpush1.msra.mxu0 0.0
    %1278 = vmatprep.subr.mxu0 0.0
    %1279 = vmatpush1.msra.mxu0 0.0
    %1280 = vmatprep.subr.mxu0 0.0
    %1281 = vmatpush1.msra.mxu0 0.0
    %1282 = vmatprep.subr.mxu0 0.0
    %1283 = vmatpush1.msra.mxu0 0.0
    %1284 = vmatprep.subr.mxu0 0.0
    %1285 = vmatpush1.msra.mxu0 0.0
    %1286 = vmatprep.subr.mxu0 0.0
    %1287 = vmatpush1.msra.mxu0 0.0
    %1288 = vmatprep.subr.mxu0 0.0
    %1289 = vmatpush1.msra.mxu0 0.0
    %1290 = vmatprep.subr.mxu0 0.0
    %1291 = vmatpush1.msra.mxu0 0.0
    %1292 = vmatprep.subr.mxu0 0.0
    %1293 = vmatpush1.msra.mxu0 0.0
    %1294 = vmatprep.subr.mxu0 0.0
    %1295 = vmatpush1.msra.mxu0 0.0
    %1296 = vmatprep.mubr.f32.mxu0 0.0
    %1297 = vmatmul.mubr.f32.gmra.mrb[0].mxu0 %v1230
    %v1298 = vpop.f32.mrb[0].mxu0
    %v1299 = vadd.f32 %v1228, %v1298
    %v1300 = vpop.f32.mrb[0].mxu0
    %1301 = vdwg.mxu0
    %v1302 = vtanh.pop %v1299
    %vm1303 = vcmask 58368
    %1304 = vst.msk [vmem:[#allocation3] sm:$0x3] %vm1303, %v1302
    // Predicated region
    $region34: #{decoder_forward.1} parent=1 // pred_check
      _
    $region35: #{decoder_forward.1} parent=1 // pred_check_branch
      %1306 = sbr.rel (0) target = $region37
    $region36: #{decoder_forward.1} parent=1 // pred_region
      _
    $region37: #{decoder_forward.1} parent=1 // pred_fallthru
      _
    // Predicated region
    $region38: #{decoder_forward.1} parent=1 // pred_check
      _
    $region39: #{decoder_forward.1} parent=1 // pred_check_branch
      %1308 = sbr.rel (0) target = $region41
    $region40: #{decoder_forward.1} parent=1 // pred_region
      %s1310 = ssub.s32 32, 32
      %1311 = vsyncadd [#allocation4], %s1310
      %s1313 = sshll.u32 [#allocation3], 4
      %s1314 = int_to_ptr.vmem [resolvable:$true] %s1313
      %1316 = dma.vmem_to_hbm [thread:$0]  %s1314, 32, %s9, [#allocation4]
    $region41: #{decoder_forward.1} parent=1 // pred_fallthru
      _
    // Predicated region
    $region42: #{decoder_forward.1} parent=1 // pred_check
      _
    $region43: #{decoder_forward.1} parent=1 // pred_check_branch
      %1318 = sbr.rel (0) target = $region45
    $region44: #{decoder_forward.1} parent=1 // pred_region
      _
    $region45: #{decoder_forward.1} parent=1 // pred_fallthru
      _
    // Predicated region
    $region46: #{decoder_forward.1} parent=1 // pred_check
      _
    $region47: #{decoder_forward.1} parent=1 // pred_check_branch
      %1320 = sbr.rel (0) target = $region49
    $region48: #{decoder_forward.1} parent=1 // pred_region
      %1321 = dma.done [#allocation4], 32
    $region49: #{decoder_forward.1} parent=1 // pred_fallthru
      _
    %1322 = vsyncpa [#allocation4], 1

</llo_original>
